<compile_context>
chip_gen: v7x
topology: tpu7x:2x2x1
jax: 0.10.0
libtpu: 0.0.40
codegen_flags: <defaults>
</compile_context>

<pallas_src>
import jax
import jax.numpy as jnp
from jax import lax
from jax.experimental import pallas as pl
from jax.experimental.pallas import tpu as pltpu
import numpy as np

EPS = 1e-5      # nn.InstanceNorm2d default
LANE = 128      # TPU lane width; channel padding target


def _round_up(x, m):
    return (x + m - 1) // m * m


def _down_kernel(x_ref, w1_ref, b1_ref, w2_ref, b2_ref,
                 a1_ref, ab1_ref, a2_ref, ab2_ref,
                 o_ref, pad1_ref, pad2_ref):
    # x_ref: (1, H, Wp, 2*Cin) -- W pool-pairs folded into the lane axis (free reshape)
    _, H, Wp, two_cin = x_ref.shape
    Cin = two_cin // 2
    Hp = H // 2
    HW = Hp * Wp
    Cout = pad2_ref.shape[-1]        # true output channels
    CP = o_ref.shape[-1]             # lane-padded output channels (multiple of 128)

    # --- MaxPool2d(2), in-kernel ------------------------------------------------------
    x = x_ref[0]                                        # (H, Wp, 2*Cin)
    xw = jnp.maximum(x[:, :, :Cin], x[:, :, Cin:])      # pool over W pairs -> (H, Wp, Cin)
    xw = xw.reshape(Hp, 2, Wp, Cin)                     # free leading-dim split
    xp = jnp.maximum(xw[:, 0], xw[:, 1])                # pool over H pairs -> (Hp, Wp, Cin)

    def instance_norm(y):  # y: (HW, C); per-channel norm over spatial, biased variance
        m = jnp.mean(y, axis=0, keepdims=True)
        v = jnp.mean((y - m) ** 2, axis=0, keepdims=True)
        return (y - m) * lax.rsqrt(v + EPS)

    def conv3x3(pad_ref, src_hwc, w_ref, b_ref):
        # im2col: build one (HW, 9*C) patch and do a single MXU matmul (K = 9*C).
        Hq, Wq, C = pad_ref.shape
        # Re-zero only the 1-pixel border (interior is fully overwritten below).  Done
        # every iteration: with a "parallel" grid the second megacore TC never sees
        # program_id==0, so a one-time init would leave its scratch border stale.
        pad_ref[0:1] = jnp.zeros((1, Wq, C), jnp.float32)
        pad_ref[Hq - 1:Hq] = jnp.zeros((1, Wq, C), jnp.float32)
        pad_ref[:, 0:1] = jnp.zeros((Hq, 1, C), jnp.float32)
        pad_ref[:, Wq - 1:Wq] = jnp.zeros((Hq, 1, C), jnp.float32)
        pad_ref[1:Hp + 1, 1:Wp + 1, :] = src_hwc
        taps = [pad_ref[dy:dy + Hp, dx:dx + Wp, :]
                for dy in range(3) for dx in range(3)]
        patch = jnp.concatenate(taps, axis=-1).reshape(HW, 9 * C)   # (HW, 9*C)
        return jnp.dot(patch, w_ref[...],
                       preferred_element_type=jnp.float32) + b_ref[...]   # (HW, CP)

    # --- double_conv: conv3x3 -> IN -> ReLU -> conv3x3 -> IN ---------------------------
    h = conv3x3(pad1_ref, xp, w1_ref, b1_ref)                       # (HW, CP)
    h = jnp.maximum(instance_norm(h), 0.0)
    h_true = h[:, :Cout].reshape(Hp, Wp, Cout)                      # drop lane padding for K
    out_conv = instance_norm(conv3x3(pad2_ref, h_true, w2_ref, b2_ref))   # (HW, CP)

    # --- attention_like on concat([input, out_conv], C): single fused 1x1 matmul -------
    xp_flat = xp.reshape(HW, Cin)
    attn_in = jnp.concatenate([xp_flat, out_conv[:, :Cout]], axis=-1)     # (HW, Cin+Cout)
    z = jnp.dot(attn_in, a1_ref[...], preferred_element_type=jnp.float32) + ab1_ref[...]
    z = jnp.maximum(instance_norm(z), 0.0)
    z = jnp.dot(z, a2_ref[...], preferred_element_type=jnp.float32) + ab2_ref[...]
    z = instance_norm(z)

    # out = relu(2*tanh(attn) + out_conv)   (inplace ReLU in PyTorch)
    res = jnp.maximum(2.0 * jnp.tanh(z) + out_conv, 0.0)
    o_ref[0] = res.reshape(Hp, Wp, CP).astype(o_ref.dtype)          # lane-dense store


def down_forward(x_nchw, params):
    """x_nchw: (N, Cin, H, W) float32 -> (N, Cout, H/2, W/2) float32."""
    w1, b1, w2, b2, a1, ab1, a2, ab2 = params
    N, Cin, H, W = x_nchw.shape
    Cout = w1.shape[0]
    Hp, Wp = H // 2, W // 2
    CP = _round_up(Cout, LANE)

    # One NCHW->NHWC relayout (required by the PyTorch-facing layout), then a FREE
    # reshape folding the 2x2-pool W-pairs into the lane axis; pooling is in-kernel.
    x_nhwc = jnp.transpose(x_nchw, (0, 2, 3, 1))                 # (N, H, W, Cin)
    x_folded = x_nhwc.reshape(N, H, Wp, 2 * Cin)                 # free reshape

    # weights -> im2col / 1x1 matmul form, lane-padded to CP output channels
    def pad_out(w):  # (K, Cout) -> (K, CP)
        return jnp.pad(w, ((0, 0), (0, CP - Cout)))

    w1k = pad_out(jnp.transpose(w1, (2, 3, 1, 0)).reshape(9 * Cin, Cout))    # (9*Cin, CP)
    w2k = pad_out(jnp.transpose(w2, (2, 3, 1, 0)).reshape(9 * Cout, Cout))   # (9*Cout, CP)
    a1k = pad_out(jnp.transpose(a1[:, :, 0, 0], (1, 0)))                     # (Cin+Cout, CP)
    a2k = jnp.pad(jnp.transpose(a2[:, :, 0, 0], (1, 0)),
                  ((0, CP - Cout), (0, CP - Cout)))                          # (CP, CP)
    b1k = pad_out(b1.reshape(1, Cout))
    b2k = pad_out(b2.reshape(1, Cout))
    ab1k = pad_out(ab1.reshape(1, Cout))
    ab2k = pad_out(ab2.reshape(1, Cout))

    grid_spec = pltpu.PrefetchScalarGridSpec(
        num_scalar_prefetch=0,
        grid=(N,),
        in_specs=[
            pl.BlockSpec((1, H, Wp, 2 * Cin), lambda n: (n, 0, 0, 0)),
            pl.BlockSpec((9 * Cin, CP), lambda n: (0, 0)),
            pl.BlockSpec((1, CP), lambda n: (0, 0)),
            pl.BlockSpec((9 * Cout, CP), lambda n: (0, 0)),
            pl.BlockSpec((1, CP), lambda n: (0, 0)),
            pl.BlockSpec((Cin + Cout, CP), lambda n: (0, 0)),
            pl.BlockSpec((1, CP), lambda n: (0, 0)),
            pl.BlockSpec((CP, CP), lambda n: (0, 0)),
            pl.BlockSpec((1, CP), lambda n: (0, 0)),
        ],
        out_specs=pl.BlockSpec((1, Hp, Wp, CP), lambda n: (n, 0, 0, 0)),
        scratch_shapes=[
            pltpu.VMEM((Hp + 2, Wp + 2, Cin), jnp.float32),   # padded buffer, conv1
            pltpu.VMEM((Hp + 2, Wp + 2, Cout), jnp.float32),  # padded buffer, conv2
        ],
    )
    out_padded = pl.pallas_call(
        _down_kernel,
        out_shape=jax.ShapeDtypeStruct((N, Hp, Wp, CP), jnp.float32),
        grid_spec=grid_spec,
        compiler_params=pltpu.CompilerParams(
            dimension_semantics=("parallel",)),
    )(x_folded, w1k, b1k, w2k, b2k, a1k, ab1k, a2k, ab2k)
    # strip channel padding, back to NCHW
    return jnp.transpose(out_padded[:, :, :, :Cout], (0, 3, 1, 2))


def down_reference(x, params):
    """Pure-JAX NCHW reference matching the PyTorch module."""
    w1, b1, w2, b2, a1, ab1, a2, ab2 = params
    N, C, H, W = x.shape
    xp = x.reshape(N, C, H // 2, 2, W // 2, 2).max(axis=(3, 5))

    def conv(x, w, b, pad):
        y = lax.conv_general_dilated(
            x, w, (1, 1), ((pad, pad), (pad, pad)),
            dimension_numbers=("NCHW", "OIHW", "NCHW"),
            precision=lax.Precision.HIGHEST)
        return y + b[None, :, None, None]

    def inorm(y):
        m = y.mean(axis=(2, 3), keepdims=True)
        v = ((y - m) ** 2).mean(axis=(2, 3), keepdims=True)
        return (y - m) / jnp.sqrt(v + EPS)

    h = jax.nn.relu(inorm(conv(xp, w1, b1, 1)))
    out_conv = inorm(conv(h, w2, b2, 1))
    attn_in = jnp.concatenate([xp, out_conv], axis=1)
    z = jax.nn.relu(inorm(conv(attn_in, a1, ab1, 0)))
    z = inorm(conv(z, a2, ab2, 0))
    return jax.nn.relu(2.0 * jnp.tanh(z) + out_conv)


if __name__ == "__main__":
    key = jax.random.PRNGKey(0)
    N, Cin, Cout, H, W = 2, 4, 8, 16, 16
    ks = jax.random.split(key, 9)
    x = jax.random.normal(ks[0], (N, Cin, H, W), jnp.float32)
    # deterministic synthetic parameters (shapes from the nn.Module __init__)
    w1 = 0.2 * jax.random.normal(ks[1], (Cout, Cin, 3, 3), jnp.float32)
    b1 = 0.1 * jax.random.normal(ks[2], (Cout,), jnp.float32)
    w2 = 0.2 * jax.random.normal(ks[3], (Cout, Cout, 3, 3), jnp.float32)
    b2 = 0.1 * jax.random.normal(ks[4], (Cout,), jnp.float32)
    a1 = 0.2 * jax.random.normal(ks[5], (Cout, Cin + Cout, 1, 1), jnp.float32)
    ab1 = 0.1 * jax.random.normal(ks[6], (Cout,), jnp.float32)
    a2 = 0.2 * jax.random.normal(ks[7], (Cout, Cout, 1, 1), jnp.float32)
    ab2 = 0.1 * jax.random.normal(ks[8], (Cout,), jnp.float32)
    params = (w1, b1, w2, b2, a1, ab1, a2, ab2)

    out = jax.block_until_ready(down_forward(x, params))
    ref = jax.block_until_ready(down_reference(x, params))
    assert out.shape == (N, Cout, H // 2, W // 2)
    np.testing.assert_allclose(np.asarray(out), np.asarray(ref), atol=2e-3, rtol=2e-3)
    print("KERNEL_OK")
</pallas_src>

<mosaic_0001>
module attributes {stable_mosaic.version = 11 : i64} {
  func.func @_down_kernel(%arg0: i32, %arg1: memref<1x16x8x8xf32, #tpu.memory_space<vmem>>, %arg2: memref<36x128xf32, #tpu.memory_space<vmem>>, %arg3: memref<1x128xf32, #tpu.memory_space<vmem>>, %arg4: memref<72x128xf32, #tpu.memory_space<vmem>>, %arg5: memref<1x128xf32, #tpu.memory_space<vmem>>, %arg6: memref<12x128xf32, #tpu.memory_space<vmem>>, %arg7: memref<1x128xf32, #tpu.memory_space<vmem>>, %arg8: memref<128x128xf32, #tpu.memory_space<vmem>>, %arg9: memref<1x128xf32, #tpu.memory_space<vmem>>, %arg10: memref<1x8x8x128xf32, #tpu.memory_space<vmem>>, %arg11: memref<10x10x4xf32, #tpu.memory_space<vmem>>, %arg12: memref<10x10x8xf32, #tpu.memory_space<vmem>>) attributes {dimension_semantics = [#tpu.dimension_semantics<parallel>], iteration_bounds = array<i64: 2>, scalar_prefetch = 0 : i64, scratch_operands = 2 : i64, tpu.core_type = #tpu.core_type<tc>, window_params = [{transform_indices = @transform_0, window_bounds = array<i64: 1, 16, 8, 8>}, {pipeline_mode = #tpu.pipeline_mode<synchronous>, transform_indices = @transform_1, window_bounds = array<i64: 36, 128>}, {pipeline_mode = #tpu.pipeline_mode<synchronous>, transform_indices = @transform_2, window_bounds = array<i64: 1, 128>}, {pipeline_mode = #tpu.pipeline_mode<synchronous>, transform_indices = @transform_3, window_bounds = array<i64: 72, 128>}, {pipeline_mode = #tpu.pipeline_mode<synchronous>, transform_indices = @transform_4, window_bounds = array<i64: 1, 128>}, {pipeline_mode = #tpu.pipeline_mode<synchronous>, transform_indices = @transform_5, window_bounds = array<i64: 12, 128>}, {pipeline_mode = #tpu.pipeline_mode<synchronous>, transform_indices = @transform_6, window_bounds = array<i64: 1, 128>}, {pipeline_mode = #tpu.pipeline_mode<synchronous>, transform_indices = @transform_7, window_bounds = array<i64: 128, 128>}, {pipeline_mode = #tpu.pipeline_mode<synchronous>, transform_indices = @transform_8, window_bounds = array<i64: 1, 128>}, {transform_indices = @transform_9, window_bounds = array<i64: 1, 8, 8, 128>}]} {
    %c0 = arith.constant 0 : index
    %c0_0 = arith.constant 0 : index
    %c0_1 = arith.constant 0 : index
    %c0_2 = arith.constant 0 : index
    %0 = vector.load %arg1[%c0, %c0_0, %c0_1, %c0_2] : memref<1x16x8x8xf32, #tpu.memory_space<vmem>>, vector<1x16x8x8xf32>
    %1 = vector.shape_cast %0 : vector<1x16x8x8xf32> to vector<16x8x8xf32>
    %2 = vector.extract_strided_slice %1 {offsets = [0, 0, 0], sizes = [16, 8, 4], strides = [1, 1, 1]} : vector<16x8x8xf32> to vector<16x8x4xf32>
    %3 = vector.extract_strided_slice %1 {offsets = [0, 0, 4], sizes = [16, 8, 4], strides = [1, 1, 1]} : vector<16x8x8xf32> to vector<16x8x4xf32>
    %4 = arith.maximumf %2, %3 : vector<16x8x4xf32>
    %5 = vector.shape_cast %4 : vector<16x8x4xf32> to vector<8x2x8x4xf32>
    %6 = vector.extract_strided_slice %5 {offsets = [0, 0, 0, 0], sizes = [8, 1, 8, 4], strides = [1, 1, 1, 1]} : vector<8x2x8x4xf32> to vector<8x1x8x4xf32>
    %7 = vector.shape_cast %6 : vector<8x1x8x4xf32> to vector<8x8x4xf32>
    %8 = vector.extract_strided_slice %5 {offsets = [0, 1, 0, 0], sizes = [8, 1, 8, 4], strides = [1, 1, 1, 1]} : vector<8x2x8x4xf32> to vector<8x1x8x4xf32>
    %9 = vector.shape_cast %8 : vector<8x1x8x4xf32> to vector<8x8x4xf32>
    %10 = arith.maximumf %7, %9 : vector<8x8x4xf32>
    %cst = arith.constant 0.000000e+00 : f32
    %11 = vector.broadcast %cst : f32 to vector<1x10x4xf32>
    %c0_3 = arith.constant 0 : index
    %c0_4 = arith.constant 0 : index
    %c0_5 = arith.constant 0 : index
    %12 = vector.load %arg11[%c0_3, %c0_4, %c0_5] : memref<10x10x4xf32, #tpu.memory_space<vmem>>, vector<1x10x4xf32>
    tpu.vector_store %arg11[%c0_3, %c0_4, %c0_5], %11 {strides = array<i32>} : memref<10x10x4xf32, #tpu.memory_space<vmem>>, vector<1x10x4xf32>,
    %cst_6 = arith.constant 0.000000e+00 : f32
    %13 = vector.broadcast %cst_6 : f32 to vector<1x10x4xf32>
    %c9 = arith.constant 9 : index
    %c0_7 = arith.constant 0 : index
    %c0_8 = arith.constant 0 : index
    %14 = vector.load %arg11[%c9, %c0_7, %c0_8] : memref<10x10x4xf32, #tpu.memory_space<vmem>>, vector<1x10x4xf32>
    tpu.vector_store %arg11[%c9, %c0_7, %c0_8], %13 {strides = array<i32>} : memref<10x10x4xf32, #tpu.memory_space<vmem>>, vector<1x10x4xf32>,
    %cst_9 = arith.constant 0.000000e+00 : f32
    %15 = vector.broadcast %cst_9 : f32 to vector<10x1x4xf32>
    %c0_10 = arith.constant 0 : index
    %c0_11 = arith.constant 0 : index
    %c0_12 = arith.constant 0 : index
    %16 = vector.load %arg11[%c0_10, %c0_11, %c0_12] : memref<10x10x4xf32, #tpu.memory_space<vmem>>, vector<10x1x4xf32>
    tpu.vector_store %arg11[%c0_10, %c0_11, %c0_12], %15 {strides = array<i32>} : memref<10x10x4xf32, #tpu.memory_space<vmem>>, vector<10x1x4xf32>,
    %cst_13 = arith.constant 0.000000e+00 : f32
    %17 = vector.broadcast %cst_13 : f32 to vector<10x1x4xf32>
    %c0_14 = arith.constant 0 : index
    %c9_15 = arith.constant 9 : index
    %c0_16 = arith.constant 0 : index
    %18 = vector.load %arg11[%c0_14, %c9_15, %c0_16] : memref<10x10x4xf32, #tpu.memory_space<vmem>>, vector<10x1x4xf32>
    tpu.vector_store %arg11[%c0_14, %c9_15, %c0_16], %17 {strides = array<i32>} : memref<10x10x4xf32, #tpu.memory_space<vmem>>, vector<10x1x4xf32>,
    %c1 = arith.constant 1 : index
    %c1_17 = arith.constant 1 : index
    %c0_18 = arith.constant 0 : index
    %19 = vector.load %arg11[%c1, %c1_17, %c0_18] : memref<10x10x4xf32, #tpu.memory_space<vmem>>, vector<8x8x4xf32>
    tpu.vector_store %arg11[%c1, %c1_17, %c0_18], %10 {strides = array<i32>} : memref<10x10x4xf32, #tpu.memory_space<vmem>>, vector<8x8x4xf32>,
    %c0_19 = arith.constant 0 : index
    %c0_20 = arith.constant 0 : index
    %c0_21 = arith.constant 0 : index
    %20 = vector.load %arg11[%c0_19, %c0_20, %c0_21] : memref<10x10x4xf32, #tpu.memory_space<vmem>>, vector<8x8x4xf32>
    %c0_22 = arith.constant 0 : index
    %c1_23 = arith.constant 1 : index
    %c0_24 = arith.constant 0 : index
    %21 = vector.load %arg11[%c0_22, %c1_23, %c0_24] : memref<10x10x4xf32, #tpu.memory_space<vmem>>, vector<8x8x4xf32>
    %c0_25 = arith.constant 0 : index
    %c2 = arith.constant 2 : index
    %c0_26 = arith.constant 0 : index
    %22 = vector.load %arg11[%c0_25, %c2, %c0_26] : memref<10x10x4xf32, #tpu.memory_space<vmem>>, vector<8x8x4xf32>
    %c1_27 = arith.constant 1 : index
    %c0_28 = arith.constant 0 : index
    %c0_29 = arith.constant 0 : index
    %23 = vector.load %arg11[%c1_27, %c0_28, %c0_29] : memref<10x10x4xf32, #tpu.memory_space<vmem>>, vector<8x8x4xf32>
    %c1_30 = arith.constant 1 : index
    %c1_31 = arith.constant 1 : index
    %c0_32 = arith.constant 0 : index
    %24 = vector.load %arg11[%c1_30, %c1_31, %c0_32] : memref<10x10x4xf32, #tpu.memory_space<vmem>>, vector<8x8x4xf32>
    %c1_33 = arith.constant 1 : index
    %c2_34 = arith.constant 2 : index
    %c0_35 = arith.constant 0 : index
    %25 = vector.load %arg11[%c1_33, %c2_34, %c0_35] : memref<10x10x4xf32, #tpu.memory_space<vmem>>, vector<8x8x4xf32>
    %c2_36 = arith.constant 2 : index
    %c0_37 = arith.constant 0 : index
    %c0_38 = arith.constant 0 : index
    %26 = vector.load %arg11[%c2_36, %c0_37, %c0_38] : memref<10x10x4xf32, #tpu.memory_space<vmem>>, vector<8x8x4xf32>
    %c2_39 = arith.constant 2 : index
    %c1_40 = arith.constant 1 : index
    %c0_41 = arith.constant 0 : index
    %27 = vector.load %arg11[%c2_39, %c1_40, %c0_41] : memref<10x10x4xf32, #tpu.memory_space<vmem>>, vector<8x8x4xf32>
    %c2_42 = arith.constant 2 : index
    %c2_43 = arith.constant 2 : index
    %c0_44 = arith.constant 0 : index
    %28 = vector.load %arg11[%c2_42, %c2_43, %c0_44] : memref<10x10x4xf32, #tpu.memory_space<vmem>>, vector<8x8x4xf32>
    %29 = tpu.concatenate %20, %21, %22, %23, %24, %25, %26, %27, %28 in 2 : vector<8x8x4xf32>, vector<8x8x4xf32>, vector<8x8x4xf32>, vector<8x8x4xf32>, vector<8x8x4xf32>, vector<8x8x4xf32>, vector<8x8x4xf32>, vector<8x8x4xf32>, vector<8x8x4xf32> -> vector<8x8x36xf32>
    %30 = vector.shape_cast %29 : vector<8x8x36xf32> to vector<64x36xf32>
    %c0_45 = arith.constant 0 : index
    %c0_46 = arith.constant 0 : index
    %31 = vector.load %arg2[%c0_45, %c0_46] : memref<36x128xf32, #tpu.memory_space<vmem>>, vector<36x128xf32>
    %cst_47 = arith.constant dense<0.000000e+00> : vector<64x128xf32>
    %32 = tpu.matmul %30, %31, %cst_47 {dimension_numbers = #tpu.dot_dimension_numbers<[1], [0], [0], [1], [0, 0, 1, 1], [], []>} : vector<64x36xf32>, vector<36x128xf32>, vector<64x128xf32> -> vector<64x128xf32>
    %c0_48 = arith.constant 0 : index
    %c0_49 = arith.constant 0 : index
    %33 = vector.load %arg3[%c0_48, %c0_49] : memref<1x128xf32, #tpu.memory_space<vmem>>, vector<1x128xf32>
    %34 = vector.broadcast %33 : vector<1x128xf32> to vector<64x128xf32>
    %35 = arith.addf %32, %34 : vector<64x128xf32>
    %cst_50 = arith.constant dense<0.000000e+00> : vector<128xf32>
    %36 = vector.multi_reduction <add>, %35, %cst_50 [0] : vector<64x128xf32> to vector<128xf32>
    %37 = vector.shape_cast %36 : vector<128xf32> to vector<1x128xf32>
    %cst_51 = arith.constant 6.400000e+01 : f32
    %38 = vector.broadcast %cst_51 : f32 to vector<1x128xf32>
    %39 = arith.divf %37, %38 : vector<1x128xf32>
    %40 = vector.broadcast %39 : vector<1x128xf32> to vector<64x128xf32>
    %41 = arith.subf %35, %40 : vector<64x128xf32>
    %42 = arith.mulf %41, %41 : vector<64x128xf32>
    %cst_52 = arith.constant dense<0.000000e+00> : vector<128xf32>
    %43 = vector.multi_reduction <add>, %42, %cst_52 [0] : vector<64x128xf32> to vector<128xf32>
    %44 = vector.shape_cast %43 : vector<128xf32> to vector<1x128xf32>
    %cst_53 = arith.constant 6.400000e+01 : f32
    %45 = vector.broadcast %cst_53 : f32 to vector<1x128xf32>
    %46 = arith.divf %44, %45 : vector<1x128xf32>
    %47 = vector.broadcast %39 : vector<1x128xf32> to vector<64x128xf32>
    %48 = arith.subf %35, %47 : vector<64x128xf32>
    %cst_54 = arith.constant 9.99999974E-6 : f32
    %49 = vector.broadcast %cst_54 : f32 to vector<1x128xf32>
    %50 = arith.addf %46, %49 : vector<1x128xf32>
    %51 = math.rsqrt %50 : vector<1x128xf32>
    %52 = vector.broadcast %51 : vector<1x128xf32> to vector<64x128xf32>
    %53 = arith.mulf %48, %52 : vector<64x128xf32>
    %cst_55 = arith.constant 0.000000e+00 : f32
    %54 = vector.broadcast %cst_55 : f32 to vector<64x128xf32>
    %55 = arith.maximumf %53, %54 : vector<64x128xf32>
    %56 = vector.extract_strided_slice %55 {offsets = [0, 0], sizes = [64, 8], strides = [1, 1]} : vector<64x128xf32> to vector<64x8xf32>
    %57 = vector.shape_cast %56 : vector<64x8xf32> to vector<8x8x8xf32>
    %cst_56 = arith.constant 0.000000e+00 : f32
    %58 = vector.broadcast %cst_56 : f32 to vector<1x10x8xf32>
    %c0_57 = arith.constant 0 : index
    %c0_58 = arith.constant 0 : index
    %c0_59 = arith.constant 0 : index
    %59 = vector.load %arg12[%c0_57, %c0_58, %c0_59] : memref<10x10x8xf32, #tpu.memory_space<vmem>>, vector<1x10x8xf32>
    tpu.vector_store %arg12[%c0_57, %c0_58, %c0_59], %58 {strides = array<i32>} : memref<10x10x8xf32, #tpu.memory_space<vmem>>, vector<1x10x8xf32>,
    %cst_60 = arith.constant 0.000000e+00 : f32
    %60 = vector.broadcast %cst_60 : f32 to vector<1x10x8xf32>
    %c9_61 = arith.constant 9 : index
    %c0_62 = arith.constant 0 : index
    %c0_63 = arith.constant 0 : index
    %61 = vector.load %arg12[%c9_61, %c0_62, %c0_63] : memref<10x10x8xf32, #tpu.memory_space<vmem>>, vector<1x10x8xf32>
    tpu.vector_store %arg12[%c9_61, %c0_62, %c0_63], %60 {strides = array<i32>} : memref<10x10x8xf32, #tpu.memory_space<vmem>>, vector<1x10x8xf32>,
    %cst_64 = arith.constant 0.000000e+00 : f32
    %62 = vector.broadcast %cst_64 : f32 to vector<10x1x8xf32>
    %c0_65 = arith.constant 0 : index
    %c0_66 = arith.constant 0 : index
    %c0_67 = arith.constant 0 : index
    %63 = vector.load %arg12[%c0_65, %c0_66, %c0_67] : memref<10x10x8xf32, #tpu.memory_space<vmem>>, vector<10x1x8xf32>
    tpu.vector_store %arg12[%c0_65, %c0_66, %c0_67], %62 {strides = array<i32>} : memref<10x10x8xf32, #tpu.memory_space<vmem>>, vector<10x1x8xf32>,
    %cst_68 = arith.constant 0.000000e+00 : f32
    %64 = vector.broadcast %cst_68 : f32 to vector<10x1x8xf32>
    %c0_69 = arith.constant 0 : index
    %c9_70 = arith.constant 9 : index
    %c0_71 = arith.constant 0 : index
    %65 = vector.load %arg12[%c0_69, %c9_70, %c0_71] : memref<10x10x8xf32, #tpu.memory_space<vmem>>, vector<10x1x8xf32>
    tpu.vector_store %arg12[%c0_69, %c9_70, %c0_71], %64 {strides = array<i32>} : memref<10x10x8xf32, #tpu.memory_space<vmem>>, vector<10x1x8xf32>,
    %c1_72 = arith.constant 1 : index
    %c1_73 = arith.constant 1 : index
    %c0_74 = arith.constant 0 : index
    %66 = vector.load %arg12[%c1_72, %c1_73, %c0_74] : memref<10x10x8xf32, #tpu.memory_space<vmem>>, vector<8x8x8xf32>
    tpu.vector_store %arg12[%c1_72, %c1_73, %c0_74], %57 {strides = array<i32>} : memref<10x10x8xf32, #tpu.memory_space<vmem>>, vector<8x8x8xf32>,
    %c0_75 = arith.constant 0 : index
    %c0_76 = arith.constant 0 : index
    %c0_77 = arith.constant 0 : index
    %67 = vector.load %arg12[%c0_75, %c0_76, %c0_77] : memref<10x10x8xf32, #tpu.memory_space<vmem>>, vector<8x8x8xf32>
    %c0_78 = arith.constant 0 : index
    %c1_79 = arith.constant 1 : index
    %c0_80 = arith.constant 0 : index
    %68 = vector.load %arg12[%c0_78, %c1_79, %c0_80] : memref<10x10x8xf32, #tpu.memory_space<vmem>>, vector<8x8x8xf32>
    %c0_81 = arith.constant 0 : index
    %c2_82 = arith.constant 2 : index
    %c0_83 = arith.constant 0 : index
    %69 = vector.load %arg12[%c0_81, %c2_82, %c0_83] : memref<10x10x8xf32, #tpu.memory_space<vmem>>, vector<8x8x8xf32>
    %c1_84 = arith.constant 1 : index
    %c0_85 = arith.constant 0 : index
    %c0_86 = arith.constant 0 : index
    %70 = vector.load %arg12[%c1_84, %c0_85, %c0_86] : memref<10x10x8xf32, #tpu.memory_space<vmem>>, vector<8x8x8xf32>
    %c1_87 = arith.constant 1 : index
    %c1_88 = arith.constant 1 : index
    %c0_89 = arith.constant 0 : index
    %71 = vector.load %arg12[%c1_87, %c1_88, %c0_89] : memref<10x10x8xf32, #tpu.memory_space<vmem>>, vector<8x8x8xf32>
    %c1_90 = arith.constant 1 : index
    %c2_91 = arith.constant 2 : index
    %c0_92 = arith.constant 0 : index
    %72 = vector.load %arg12[%c1_90, %c2_91, %c0_92] : memref<10x10x8xf32, #tpu.memory_space<vmem>>, vector<8x8x8xf32>
    %c2_93 = arith.constant 2 : index
    %c0_94 = arith.constant 0 : index
    %c0_95 = arith.constant 0 : index
    %73 = vector.load %arg12[%c2_93, %c0_94, %c0_95] : memref<10x10x8xf32, #tpu.memory_space<vmem>>, vector<8x8x8xf32>
    %c2_96 = arith.constant 2 : index
    %c1_97 = arith.constant 1 : index
    %c0_98 = arith.constant 0 : index
    %74 = vector.load %arg12[%c2_96, %c1_97, %c0_98] : memref<10x10x8xf32, #tpu.memory_space<vmem>>, vector<8x8x8xf32>
    %c2_99 = arith.constant 2 : index
    %c2_100 = arith.constant 2 : index
    %c0_101 = arith.constant 0 : index
    %75 = vector.load %arg12[%c2_99, %c2_100, %c0_101] : memref<10x10x8xf32, #tpu.memory_space<vmem>>, vector<8x8x8xf32>
    %76 = tpu.concatenate %67, %68, %69, %70, %71, %72, %73, %74, %75 in 2 : vector<8x8x8xf32>, vector<8x8x8xf32>, vector<8x8x8xf32>, vector<8x8x8xf32>, vector<8x8x8xf32>, vector<8x8x8xf32>, vector<8x8x8xf32>, vector<8x8x8xf32>, vector<8x8x8xf32> -> vector<8x8x72xf32>
    %77 = vector.shape_cast %76 : vector<8x8x72xf32> to vector<64x72xf32>
    %c0_102 = arith.constant 0 : index
    %c0_103 = arith.constant 0 : index
    %78 = vector.load %arg4[%c0_102, %c0_103] : memref<72x128xf32, #tpu.memory_space<vmem>>, vector<72x128xf32>
    %cst_104 = arith.constant dense<0.000000e+00> : vector<64x128xf32>
    %79 = tpu.matmul %77, %78, %cst_104 {dimension_numbers = #tpu.dot_dimension_numbers<[1], [0], [0], [1], [0, 0, 1, 1], [], []>} : vector<64x72xf32>, vector<72x128xf32>, vector<64x128xf32> -> vector<64x128xf32>
    %c0_105 = arith.constant 0 : index
    %c0_106 = arith.constant 0 : index
    %80 = vector.load %arg5[%c0_105, %c0_106] : memref<1x128xf32, #tpu.memory_space<vmem>>, vector<1x128xf32>
    %81 = vector.broadcast %80 : vector<1x128xf32> to vector<64x128xf32>
    %82 = arith.addf %79, %81 : vector<64x128xf32>
    %cst_107 = arith.constant dense<0.000000e+00> : vector<128xf32>
    %83 = vector.multi_reduction <add>, %82, %cst_107 [0] : vector<64x128xf32> to vector<128xf32>
    %84 = vector.shape_cast %83 : vector<128xf32> to vector<1x128xf32>
    %cst_108 = arith.constant 6.400000e+01 : f32
    %85 = vector.broadcast %cst_108 : f32 to vector<1x128xf32>
    %86 = arith.divf %84, %85 : vector<1x128xf32>
    %87 = vector.broadcast %86 : vector<1x128xf32> to vector<64x128xf32>
    %88 = arith.subf %82, %87 : vector<64x128xf32>
    %89 = arith.mulf %88, %88 : vector<64x128xf32>
    %cst_109 = arith.constant dense<0.000000e+00> : vector<128xf32>
    %90 = vector.multi_reduction <add>, %89, %cst_109 [0] : vector<64x128xf32> to vector<128xf32>
    %91 = vector.shape_cast %90 : vector<128xf32> to vector<1x128xf32>
    %cst_110 = arith.constant 6.400000e+01 : f32
    %92 = vector.broadcast %cst_110 : f32 to vector<1x128xf32>
    %93 = arith.divf %91, %92 : vector<1x128xf32>
    %94 = vector.broadcast %86 : vector<1x128xf32> to vector<64x128xf32>
    %95 = arith.subf %82, %94 : vector<64x128xf32>
    %cst_111 = arith.constant 9.99999974E-6 : f32
    %96 = vector.broadcast %cst_111 : f32 to vector<1x128xf32>
    %97 = arith.addf %93, %96 : vector<1x128xf32>
    %98 = math.rsqrt %97 : vector<1x128xf32>
    %99 = vector.broadcast %98 : vector<1x128xf32> to vector<64x128xf32>
    %100 = arith.mulf %95, %99 : vector<64x128xf32>
    %101 = vector.shape_cast %10 : vector<8x8x4xf32> to vector<64x4xf32>
    %102 = vector.extract_strided_slice %100 {offsets = [0, 0], sizes = [64, 8], strides = [1, 1]} : vector<64x128xf32> to vector<64x8xf32>
    %103 = tpu.concatenate %101, %102 in 1 : vector<64x4xf32>, vector<64x8xf32> -> vector<64x12xf32>
    %c0_112 = arith.constant 0 : index
    %c0_113 = arith.constant 0 : index
    %104 = vector.load %arg6[%c0_112, %c0_113] : memref<12x128xf32, #tpu.memory_space<vmem>>, vector<12x128xf32>
    %cst_114 = arith.constant dense<0.000000e+00> : vector<64x128xf32>
    %105 = tpu.matmul %103, %104, %cst_114 {dimension_numbers = #tpu.dot_dimension_numbers<[1], [0], [0], [1], [0, 0, 1, 1], [], []>} : vector<64x12xf32>, vector<12x128xf32>, vector<64x128xf32> -> vector<64x128xf32>
    %c0_115 = arith.constant 0 : index
    %c0_116 = arith.constant 0 : index
    %106 = vector.load %arg7[%c0_115, %c0_116] : memref<1x128xf32, #tpu.memory_space<vmem>>, vector<1x128xf32>
    %107 = vector.broadcast %106 : vector<1x128xf32> to vector<64x128xf32>
    %108 = arith.addf %105, %107 : vector<64x128xf32>
    %cst_117 = arith.constant dense<0.000000e+00> : vector<128xf32>
    %109 = vector.multi_reduction <add>, %108, %cst_117 [0] : vector<64x128xf32> to vector<128xf32>
    %110 = vector.shape_cast %109 : vector<128xf32> to vector<1x128xf32>
    %cst_118 = arith.constant 6.400000e+01 : f32
    %111 = vector.broadcast %cst_118 : f32 to vector<1x128xf32>
    %112 = arith.divf %110, %111 : vector<1x128xf32>
    %113 = vector.broadcast %112 : vector<1x128xf32> to vector<64x128xf32>
    %114 = arith.subf %108, %113 : vector<64x128xf32>
    %115 = arith.mulf %114, %114 : vector<64x128xf32>
    %cst_119 = arith.constant dense<0.000000e+00> : vector<128xf32>
    %116 = vector.multi_reduction <add>, %115, %cst_119 [0] : vector<64x128xf32> to vector<128xf32>
    %117 = vector.shape_cast %116 : vector<128xf32> to vector<1x128xf32>
    %cst_120 = arith.constant 6.400000e+01 : f32
    %118 = vector.broadcast %cst_120 : f32 to vector<1x128xf32>
    %119 = arith.divf %117, %118 : vector<1x128xf32>
    %120 = vector.broadcast %112 : vector<1x128xf32> to vector<64x128xf32>
    %121 = arith.subf %108, %120 : vector<64x128xf32>
    %cst_121 = arith.constant 9.99999974E-6 : f32
    %122 = vector.broadcast %cst_121 : f32 to vector<1x128xf32>
    %123 = arith.addf %119, %122 : vector<1x128xf32>
    %124 = math.rsqrt %123 : vector<1x128xf32>
    %125 = vector.broadcast %124 : vector<1x128xf32> to vector<64x128xf32>
    %126 = arith.mulf %121, %125 : vector<64x128xf32>
    %cst_122 = arith.constant 0.000000e+00 : f32
    %127 = vector.broadcast %cst_122 : f32 to vector<64x128xf32>
    %128 = arith.maximumf %126, %127 : vector<64x128xf32>
    %c0_123 = arith.constant 0 : index
    %c0_124 = arith.constant 0 : index
    %129 = vector.load %arg8[%c0_123, %c0_124] : memref<128x128xf32, #tpu.memory_space<vmem>>, vector<128x128xf32>
    %cst_125 = arith.constant dense<0.000000e+00> : vector<64x128xf32>
    %130 = tpu.matmul %128, %129, %cst_125 {dimension_numbers = #tpu.dot_dimension_numbers<[1], [0], [0], [1], [0, 0, 1, 1], [], []>} : vector<64x128xf32>, vector<128x128xf32>, vector<64x128xf32> -> vector<64x128xf32>
    %c0_126 = arith.constant 0 : index
    %c0_127 = arith.constant 0 : index
    %131 = vector.load %arg9[%c0_126, %c0_127] : memref<1x128xf32, #tpu.memory_space<vmem>>, vector<1x128xf32>
    %132 = vector.broadcast %131 : vector<1x128xf32> to vector<64x128xf32>
    %133 = arith.addf %130, %132 : vector<64x128xf32>
    %cst_128 = arith.constant dense<0.000000e+00> : vector<128xf32>
    %134 = vector.multi_reduction <add>, %133, %cst_128 [0] : vector<64x128xf32> to vector<128xf32>
    %135 = vector.shape_cast %134 : vector<128xf32> to vector<1x128xf32>
    %cst_129 = arith.constant 6.400000e+01 : f32
    %136 = vector.broadcast %cst_129 : f32 to vector<1x128xf32>
    %137 = arith.divf %135, %136 : vector<1x128xf32>
    %138 = vector.broadcast %137 : vector<1x128xf32> to vector<64x128xf32>
    %139 = arith.subf %133, %138 : vector<64x128xf32>
    %140 = arith.mulf %139, %139 : vector<64x128xf32>
    %cst_130 = arith.constant dense<0.000000e+00> : vector<128xf32>
    %141 = vector.multi_reduction <add>, %140, %cst_130 [0] : vector<64x128xf32> to vector<128xf32>
    %142 = vector.shape_cast %141 : vector<128xf32> to vector<1x128xf32>
    %cst_131 = arith.constant 6.400000e+01 : f32
    %143 = vector.broadcast %cst_131 : f32 to vector<1x128xf32>
    %144 = arith.divf %142, %143 : vector<1x128xf32>
    %145 = vector.broadcast %137 : vector<1x128xf32> to vector<64x128xf32>
    %146 = arith.subf %133, %145 : vector<64x128xf32>
    %cst_132 = arith.constant 9.99999974E-6 : f32
    %147 = vector.broadcast %cst_132 : f32 to vector<1x128xf32>
    %148 = arith.addf %144, %147 : vector<1x128xf32>
    %149 = math.rsqrt %148 : vector<1x128xf32>
    %150 = vector.broadcast %149 : vector<1x128xf32> to vector<64x128xf32>
    %151 = arith.mulf %146, %150 : vector<64x128xf32>
    %152 = math.tanh %151 : vector<64x128xf32>
    %cst_133 = arith.constant 2.000000e+00 : f32
    %153 = vector.broadcast %cst_133 : f32 to vector<64x128xf32>
    %154 = arith.mulf %153, %152 : vector<64x128xf32>
    %155 = arith.addf %154, %100 : vector<64x128xf32>
    %cst_134 = arith.constant 0.000000e+00 : f32
    %156 = vector.broadcast %cst_134 : f32 to vector<64x128xf32>
    %157 = arith.maximumf %155, %156 : vector<64x128xf32>
    %158 = vector.shape_cast %157 : vector<64x128xf32> to vector<8x8x128xf32>
    %c0_135 = arith.constant 0 : index
    %c0_136 = arith.constant 0 : index
    %c0_137 = arith.constant 0 : index
    %c0_138 = arith.constant 0 : index
    %159 = vector.load %arg10[%c0_135, %c0_136, %c0_137, %c0_138] : memref<1x8x8x128xf32, #tpu.memory_space<vmem>>, vector<1x8x8x128xf32>
    %160 = vector.shape_cast %159 : vector<1x8x8x128xf32> to vector<8x8x128xf32>
    %161 = vector.shape_cast %158 : vector<8x8x128xf32> to vector<1x8x8x128xf32>
    tpu.vector_store %arg10[%c0_135, %c0_136, %c0_137, %c0_138], %161 {strides = array<i32>} : memref<1x8x8x128xf32, #tpu.memory_space<vmem>>, vector<1x8x8x128xf32>,
    return
  }
  func.func @transform_0(%arg0: i32) -> (i32, i32, i32, i32) {
    %c0_i32 = arith.constant 0 : i32
    %c0_i32_0 = arith.constant 0 : i32
    %c0_i32_1 = arith.constant 0 : i32
    %c0_i32_2 = arith.constant 0 : i32
    return %arg0, %c0_i32, %c0_i32_0, %c0_i32_1 : i32, i32, i32, i32
  }
  func.func @transform_1(%arg0: i32) -> (i32, i32) {
    %c0_i32 = arith.constant 0 : i32
    %c0_i32_0 = arith.constant 0 : i32
    %c0_i32_1 = arith.constant 0 : i32
    return %c0_i32, %c0_i32_0 : i32, i32
  }
  func.func @transform_2(%arg0: i32) -> (i32, i32) {
    %c0_i32 = arith.constant 0 : i32
    %c0_i32_0 = arith.constant 0 : i32
    %c0_i32_1 = arith.constant 0 : i32
    return %c0_i32, %c0_i32_0 : i32, i32
  }
  func.func @transform_3(%arg0: i32) -> (i32, i32) {
    %c0_i32 = arith.constant 0 : i32
    %c0_i32_0 = arith.constant 0 : i32
    %c0_i32_1 = arith.constant 0 : i32
    return %c0_i32, %c0_i32_0 : i32, i32
  }
  func.func @transform_4(%arg0: i32) -> (i32, i32) {
    %c0_i32 = arith.constant 0 : i32
    %c0_i32_0 = arith.constant 0 : i32
    %c0_i32_1 = arith.constant 0 : i32
    return %c0_i32, %c0_i32_0 : i32, i32
  }
  func.func @transform_5(%arg0: i32) -> (i32, i32) {
    %c0_i32 = arith.constant 0 : i32
    %c0_i32_0 = arith.constant 0 : i32
    %c0_i32_1 = arith.constant 0 : i32
    return %c0_i32, %c0_i32_0 : i32, i32
  }
  func.func @transform_6(%arg0: i32) -> (i32, i32) {
    %c0_i32 = arith.constant 0 : i32
    %c0_i32_0 = arith.constant 0 : i32
    %c0_i32_1 = arith.constant 0 : i32
    return %c0_i32, %c0_i32_0 : i32, i32
  }
  func.func @transform_7(%arg0: i32) -> (i32, i32) {
    %c0_i32 = arith.constant 0 : i32
    %c0_i32_0 = arith.constant 0 : i32
    %c0_i32_1 = arith.constant 0 : i32
    return %c0_i32, %c0_i32_0 : i32, i32
  }
  func.func @transform_8(%arg0: i32) -> (i32, i32) {
    %c0_i32 = arith.constant 0 : i32
    %c0_i32_0 = arith.constant 0 : i32
    %c0_i32_1 = arith.constant 0 : i32
    return %c0_i32, %c0_i32_0 : i32, i32
  }
  func.func @transform_9(%arg0: i32) -> (i32, i32, i32, i32) {
    %c0_i32 = arith.constant 0 : i32
    %c0_i32_0 = arith.constant 0 : i32
    %c0_i32_1 = arith.constant 0 : i32
    %c0_i32_2 = arith.constant 0 : i32
    return %arg0, %c0_i32, %c0_i32_0, %c0_i32_1 : i32, i32, i32, i32
  }
}

</mosaic_0001>

<llo_original>
// kernel: tpu_custom_call.1
$region0: #{tpu_custom_call.1}
  #allocation0 [shape = 'u32[]', space=smem, size = 0x4, offset = 0x4, fixed_abs, tag = 'smem constant byte address 0x4 - core index']
  #allocation1 [shape = 'u32[144,128]{1,0:T(1,128)}', space=vmem, size = 0x12000, scoped, tag = 'internal scratch']
  #allocation2 [shape = 'f32[10,10,4]{2,1,0:T(8,128)}', space=vmem, size = 0x14000, scoped, tag = 'scratch operand']
  #allocation3 [shape = 'f32[10,10,8]{2,1,0:T(8,128)}', space=vmem, size = 0x14000, scoped, tag = 'scratch operand']
  %s0 = inlined_call_operand.vmem [shape: f32[2,16,8,8], index: 0, kind: input, shape index: {}]
  %s1 = inlined_call_operand.vmem [shape: f32[36,128], index: 1, kind: input, shape index: {}]
  %s2 = inlined_call_operand.vmem [shape: f32[1,128], index: 2, kind: input, shape index: {}]
  %s3 = inlined_call_operand.vmem [shape: f32[72,128], index: 3, kind: input, shape index: {}]
  %s4 = inlined_call_operand.vmem [shape: f32[1,128], index: 4, kind: input, shape index: {}]
  %s5 = inlined_call_operand.vmem [shape: f32[12,128], index: 5, kind: input, shape index: {}]
  %s6 = inlined_call_operand.vmem [shape: f32[1,128], index: 6, kind: input, shape index: {}]
  %s7 = inlined_call_operand.vmem [shape: f32[128,128], index: 7, kind: input, shape index: {}]
  %s8 = inlined_call_operand.vmem [shape: f32[1,128], index: 8, kind: input, shape index: {}]
  %s9 = inlined_call_operand.hbm [shape: f32[2,8,8,128], index: 9, kind: output, shape index: {}]
  %s10 = sld [smem:[#allocation0]]
  $region69: #{tpu_custom_call.1} parent=0
    _
  %s12 = ssub.s32 1, %s10
  %s13 = scalar_select 0, %s12, %s10
  $region1: #{tpu_custom_call.1} parent=0
    #allocation4 [shape = 'u8[65536]{0}', space=vmem, size = 0x10000, scoped, tag = 'output window, operand 0']
    #allocation5 [shape = 's32[2]{0}', space=sflag, size = 0x8, scoped, tag = 'scoped memory for tpu_custom_call.1']
    %14 = vsyncpa [#allocation5], 0
    %s15 = scalar_lea.sflag [#allocation5], 1
    %16 = vsyncpa %s15, 0
    loop: start=0, step=1, limit=4
    $region2: #{tpu_custom_call.1} parent=1 // loop_pre_header
      _
    $region3: #{tpu_custom_call.1} parent=1 // loop_header
      %s18 = sphi 0, %s22
      %p19 = scmp.ge.s32.totalorder %s18, 4
      %s28 = sphi 0, %s30
      %s31 = sphi 0, %s28
      %s32 = sphi 0, %s31
      %s48 = sphi 0, %s32
      %s52 = sphi 0, %s52
      %s54 = sphi 0, %s52
      %s55 = sphi 0, %s54
      %s69 = sphi 0, %s55
      %s73 = sphi 0, %s73
      %s75 = sphi 0, %s73
      %s76 = sphi 0, %s75
      %s90 = sphi 0, %s76
      %s94 = sphi 0, %s94
      %s96 = sphi 0, %s94
      %s97 = sphi 0, %s96
      %s111 = sphi 0, %s97
      %s115 = sphi 0, %s115
      %s117 = sphi 0, %s115
      %s118 = sphi 0, %s117
      %s132 = sphi 0, %s118
      %s136 = sphi 0, %s136
      %s138 = sphi 0, %s136
      %s139 = sphi 0, %s138
      %s153 = sphi 0, %s139
      %s157 = sphi 0, %s157
      %s159 = sphi 0, %s157
      %s160 = sphi 0, %s159
      %s174 = sphi 0, %s160
      %s178 = sphi 0, %s178
      %s180 = sphi 0, %s178
      %s181 = sphi 0, %s180
      %s195 = sphi 0, %s181
      %s199 = sphi 0, %s199
      %s201 = sphi 0, %s199
      %s202 = sphi 0, %s201
      %s216 = sphi 0, %s202
      %s222 = sphi 0, %s224
      %s225 = sphi 0, %s222
      %s226 = sphi 0, %s225
      %s242 = sphi 0, %s226
    $region4: #{tpu_custom_call.1} parent=1 // loop_header_branch
      %21 = sbr.rel (%p19) target = $region8
    $region5: #{tpu_custom_call.1} parent=1 // loop_body
      %s23 = ssub.s32 %s18, 1
      %s24 = ssub.s32 %s18, 2
      %s25 = sadd.s32 %s18, 1
      %s26 = ssub.s32 %s18, %s25
      %p27 = scmp.eq.s32.totalorder %s26, 0
      %s29 = sadd.s32 %s28, 1
      %s30 = scalar_select %p27, %s28, %s29
      %p33 = pneg %p27
      %p34 = scmp.eq.s32.totalorder %s18, 1
      %p35 = por %p33, %p34
      %p36 = scmp.ne.s32.totalorder %s28, %s31
      %p37 = scmp.eq.s32.totalorder %s18, 0
      %p38 = por %p36, %p37
      %p39 = scmp.ne.s32.totalorder %s28, %s31
      %p40 = scmp.eq.s32.totalorder %s23, 1
      %p41 = por %p39, %p40
      %p42 = scmp.ne.s32.totalorder %s31, %s32
      %p43 = scmp.eq.s32.totalorder %s23, 0
      %p44 = por %p42, %p43
      %p45 = scmp.ne.s32.totalorder %s31, %s32
      %p46 = scmp.eq.s32.totalorder %s24, 1
      %p47 = por %p45, %p46
      %p49 = scmp.ne.s32.totalorder %s32, %s48
      %p50 = scmp.eq.s32.totalorder %s24, 0
      %p51 = por %p49, %p50
      %s53 = sadd.s32 %s52, 1
      %p56 = scmp.eq.s32.totalorder %s18, 1
      %p57 = scmp.ne.s32.totalorder %s52, %s54
      %p58 = scmp.eq.s32.totalorder %s18, 0
      %p59 = por %p57, %p58
      %p60 = scmp.ne.s32.totalorder %s52, %s54
      %p61 = scmp.eq.s32.totalorder %s23, 1
      %p62 = por %p60, %p61
      %p63 = scmp.ne.s32.totalorder %s54, %s55
      %p64 = scmp.eq.s32.totalorder %s23, 0
      %p65 = por %p63, %p64
      %p66 = scmp.ne.s32.totalorder %s54, %s55
      %p67 = scmp.eq.s32.totalorder %s24, 1
      %p68 = por %p66, %p67
      %p70 = scmp.ne.s32.totalorder %s55, %s69
      %p71 = scmp.eq.s32.totalorder %s24, 0
      %p72 = por %p70, %p71
      %s74 = sadd.s32 %s73, 1
      %p77 = scmp.eq.s32.totalorder %s18, 1
      %p78 = scmp.ne.s32.totalorder %s73, %s75
      %p79 = scmp.eq.s32.totalorder %s18, 0
      %p80 = por %p78, %p79
      %p81 = scmp.ne.s32.totalorder %s73, %s75
      %p82 = scmp.eq.s32.totalorder %s23, 1
      %p83 = por %p81, %p82
      %p84 = scmp.ne.s32.totalorder %s75, %s76
      %p85 = scmp.eq.s32.totalorder %s23, 0
      %p86 = por %p84, %p85
      %p87 = scmp.ne.s32.totalorder %s75, %s76
      %p88 = scmp.eq.s32.totalorder %s24, 1
      %p89 = por %p87, %p88
      %p91 = scmp.ne.s32.totalorder %s76, %s90
      %p92 = scmp.eq.s32.totalorder %s24, 0
      %p93 = por %p91, %p92
      %s95 = sadd.s32 %s94, 1
      %p98 = scmp.eq.s32.totalorder %s18, 1
      %p99 = scmp.ne.s32.totalorder %s94, %s96
      %p100 = scmp.eq.s32.totalorder %s18, 0
      %p101 = por %p99, %p100
      %p102 = scmp.ne.s32.totalorder %s94, %s96
      %p103 = scmp.eq.s32.totalorder %s23, 1
      %p104 = por %p102, %p103
      %p105 = scmp.ne.s32.totalorder %s96, %s97
      %p106 = scmp.eq.s32.totalorder %s23, 0
      %p107 = por %p105, %p106
      %p108 = scmp.ne.s32.totalorder %s96, %s97
      %p109 = scmp.eq.s32.totalorder %s24, 1
      %p110 = por %p108, %p109
      %p112 = scmp.ne.s32.totalorder %s97, %s111
      %p113 = scmp.eq.s32.totalorder %s24, 0
      %p114 = por %p112, %p113
      %s116 = sadd.s32 %s115, 1
      %p119 = scmp.eq.s32.totalorder %s18, 1
      %p120 = scmp.ne.s32.totalorder %s115, %s117
      %p121 = scmp.eq.s32.totalorder %s18, 0
      %p122 = por %p120, %p121
      %p123 = scmp.ne.s32.totalorder %s115, %s117
      %p124 = scmp.eq.s32.totalorder %s23, 1
      %p125 = por %p123, %p124
      %p126 = scmp.ne.s32.totalorder %s117, %s118
      %p127 = scmp.eq.s32.totalorder %s23, 0
      %p128 = por %p126, %p127
      %p129 = scmp.ne.s32.totalorder %s117, %s118
      %p130 = scmp.eq.s32.totalorder %s24, 1
      %p131 = por %p129, %p130
      %p133 = scmp.ne.s32.totalorder %s118, %s132
      %p134 = scmp.eq.s32.totalorder %s24, 0
      %p135 = por %p133, %p134
      %s137 = sadd.s32 %s136, 1
      %p140 = scmp.eq.s32.totalorder %s18, 1
      %p141 = scmp.ne.s32.totalorder %s136, %s138
      %p142 = scmp.eq.s32.totalorder %s18, 0
      %p143 = por %p141, %p142
      %p144 = scmp.ne.s32.totalorder %s136, %s138
      %p145 = scmp.eq.s32.totalorder %s23, 1
      %p146 = por %p144, %p145
      %p147 = scmp.ne.s32.totalorder %s138, %s139
      %p148 = scmp.eq.s32.totalorder %s23, 0
      %p149 = por %p147, %p148
      %p150 = scmp.ne.s32.totalorder %s138, %s139
      %p151 = scmp.eq.s32.totalorder %s24, 1
      %p152 = por %p150, %p151
      %p154 = scmp.ne.s32.totalorder %s139, %s153
      %p155 = scmp.eq.s32.totalorder %s24, 0
      %p156 = por %p154, %p155
      %s158 = sadd.s32 %s157, 1
      %p161 = scmp.eq.s32.totalorder %s18, 1
      %p162 = scmp.ne.s32.totalorder %s157, %s159
      %p163 = scmp.eq.s32.totalorder %s18, 0
      %p164 = por %p162, %p163
      %p165 = scmp.ne.s32.totalorder %s157, %s159
      %p166 = scmp.eq.s32.totalorder %s23, 1
      %p167 = por %p165, %p166
      %p168 = scmp.ne.s32.totalorder %s159, %s160
      %p169 = scmp.eq.s32.totalorder %s23, 0
      %p170 = por %p168, %p169
      %p171 = scmp.ne.s32.totalorder %s159, %s160
      %p172 = scmp.eq.s32.totalorder %s24, 1
      %p173 = por %p171, %p172
      %p175 = scmp.ne.s32.totalorder %s160, %s174
      %p176 = scmp.eq.s32.totalorder %s24, 0
      %p177 = por %p175, %p176
      %s179 = sadd.s32 %s178, 1
      %p182 = scmp.eq.s32.totalorder %s18, 1
      %p183 = scmp.ne.s32.totalorder %s178, %s180
      %p184 = scmp.eq.s32.totalorder %s18, 0
      %p185 = por %p183, %p184
      %p186 = scmp.ne.s32.totalorder %s178, %s180
      %p187 = scmp.eq.s32.totalorder %s23, 1
      %p188 = por %p186, %p187
      %p189 = scmp.ne.s32.totalorder %s180, %s181
      %p190 = scmp.eq.s32.totalorder %s23, 0
      %p191 = por %p189, %p190
      %p192 = scmp.ne.s32.totalorder %s180, %s181
      %p193 = scmp.eq.s32.totalorder %s24, 1
      %p194 = por %p192, %p193
      %p196 = scmp.ne.s32.totalorder %s181, %s195
      %p197 = scmp.eq.s32.totalorder %s24, 0
      %p198 = por %p196, %p197
      %s200 = sadd.s32 %s199, 1
      %p203 = scmp.eq.s32.totalorder %s18, 1
      %p204 = scmp.ne.s32.totalorder %s199, %s201
      %p205 = scmp.eq.s32.totalorder %s18, 0
      %p206 = por %p204, %p205
      %p207 = scmp.ne.s32.totalorder %s199, %s201
      %p208 = scmp.eq.s32.totalorder %s23, 1
      %p209 = por %p207, %p208
      %p210 = scmp.ne.s32.totalorder %s201, %s202
      %p211 = scmp.eq.s32.totalorder %s23, 0
      %p212 = por %p210, %p211
      %p213 = scmp.ne.s32.totalorder %s201, %s202
      %p214 = scmp.eq.s32.totalorder %s24, 1
      %p215 = por %p213, %p214
      %p217 = scmp.ne.s32.totalorder %s202, %s216
      %p218 = scmp.eq.s32.totalorder %s24, 0
      %p219 = por %p217, %p218
      %s220 = ssub.s32 %s18, %s25
      %p221 = scmp.eq.s32.totalorder %s220, 0
      %s223 = sadd.s32 %s222, 1
      %s224 = scalar_select %p221, %s222, %s223
      %p227 = pneg %p221
      %p228 = scmp.eq.s32.totalorder %s18, 1
      %p229 = por %p227, %p228
      %p230 = scmp.ne.s32.totalorder %s222, %s225
      %p231 = scmp.eq.s32.totalorder %s18, 0
      %p232 = por %p230, %p231
      %p233 = scmp.ne.s32.totalorder %s222, %s225
      %p234 = scmp.eq.s32.totalorder %s23, 1
      %p235 = por %p233, %p234
      %p236 = scmp.ne.s32.totalorder %s225, %s226
      %p237 = scmp.eq.s32.totalorder %s23, 0
      %p238 = por %p236, %p237
      %p239 = scmp.ne.s32.totalorder %s225, %s226
      %p240 = scmp.eq.s32.totalorder %s24, 1
      %p241 = por %p239, %p240
      %p243 = scmp.ne.s32.totalorder %s226, %s242
      %p244 = scmp.eq.s32.totalorder %s24, 0
      %p245 = por %p243, %p244
      %p246 = scmp.le.s32.totalorder 1, %s18
      %p247 = scmp.lt.s32.totalorder %s18, 3
      %p248 = pnand %p246, %p247
      %p249 = pneg %p248
      // Predicated region
      $region9: #{tpu_custom_call.1} parent=5 // pred_check
        _
      $region10: #{tpu_custom_call.1} parent=5 // pred_check_branch
        %251 = sbr.rel (%p248) target = $region12
      $region11: #{tpu_custom_call.1} parent=5 // pred_region
        %s252 = ssub.s32 %s18, 1
        // Predicated region
        $region13: #{tpu_custom_call.1} parent=11 // pred_check
          %p253 = pneg %p65
        $region14: #{tpu_custom_call.1} parent=11 // pred_check_branch
          %255 = sbr.rel (%p253) target = $region16
        $region15: #{tpu_custom_call.1} parent=11 // pred_region
          _
        $region16: #{tpu_custom_call.1} parent=11 // pred_fallthru
          _
        // Predicated region
        $region17: #{tpu_custom_call.1} parent=11 // pred_check
          %p256 = pneg %p86
        $region18: #{tpu_custom_call.1} parent=11 // pred_check_branch
          %258 = sbr.rel (%p256) target = $region20
        $region19: #{tpu_custom_call.1} parent=11 // pred_region
          _
        $region20: #{tpu_custom_call.1} parent=11 // pred_fallthru
          _
        // Predicated region
        $region21: #{tpu_custom_call.1} parent=11 // pred_check
          %p259 = pneg %p107
        $region22: #{tpu_custom_call.1} parent=11 // pred_check_branch
          %261 = sbr.rel (%p259) target = $region24
        $region23: #{tpu_custom_call.1} parent=11 // pred_region
          _
        $region24: #{tpu_custom_call.1} parent=11 // pred_fallthru
          _
        // Predicated region
        $region25: #{tpu_custom_call.1} parent=11 // pred_check
          %p262 = pneg %p128
        $region26: #{tpu_custom_call.1} parent=11 // pred_check_branch
          %264 = sbr.rel (%p262) target = $region28
        $region27: #{tpu_custom_call.1} parent=11 // pred_region
          _
        $region28: #{tpu_custom_call.1} parent=11 // pred_fallthru
          _
        // Predicated region
        $region29: #{tpu_custom_call.1} parent=11 // pred_check
          %p265 = pneg %p149
        $region30: #{tpu_custom_call.1} parent=11 // pred_check_branch
          %267 = sbr.rel (%p265) target = $region32
        $region31: #{tpu_custom_call.1} parent=11 // pred_region
          _
        $region32: #{tpu_custom_call.1} parent=11 // pred_fallthru
          _
        // Predicated region
        $region33: #{tpu_custom_call.1} parent=11 // pred_check
          %p268 = pneg %p170
        $region34: #{tpu_custom_call.1} parent=11 // pred_check_branch
          %270 = sbr.rel (%p268) target = $region36
        $region35: #{tpu_custom_call.1} parent=11 // pred_region
          _
        $region36: #{tpu_custom_call.1} parent=11 // pred_fallthru
          _
        // Predicated region
        $region37: #{tpu_custom_call.1} parent=11 // pred_check
          %p271 = pneg %p191
        $region38: #{tpu_custom_call.1} parent=11 // pred_check_branch
          %273 = sbr.rel (%p271) target = $region40
        $region39: #{tpu_custom_call.1} parent=11 // pred_region
          _
        $region40: #{tpu_custom_call.1} parent=11 // pred_fallthru
          _
        // Predicated region
        $region41: #{tpu_custom_call.1} parent=11 // pred_check
          %p274 = pneg %p212
        $region42: #{tpu_custom_call.1} parent=11 // pred_check_branch
          %276 = sbr.rel (%p274) target = $region44
        $region43: #{tpu_custom_call.1} parent=11 // pred_region
          _
        $region44: #{tpu_custom_call.1} parent=11 // pred_fallthru
          _
      $region12: #{tpu_custom_call.1} parent=5 // pred_fallthru
        _
      %p277 = scmp.lt.s32.totalorder %s18, 2
      // Predicated region
      $region45: #{tpu_custom_call.1} parent=5 // pred_check
        %p278 = pneg %p277
      $region46: #{tpu_custom_call.1} parent=5 // pred_check_branch
        %280 = sbr.rel (%p278) target = $region48
      $region47: #{tpu_custom_call.1} parent=5 // pred_region
        // Predicated region
        $region49: #{tpu_custom_call.1} parent=47 // pred_check
          %p281 = pneg %p38
        $region50: #{tpu_custom_call.1} parent=47 // pred_check_branch
          %283 = sbr.rel (%p281) target = $region52
        $region51: #{tpu_custom_call.1} parent=47 // pred_region
          %p284 = scmp.lt.s32.totalorder %s18, 1
          %s285 = scalar_select %p284, %s18, 1
          %s286 = smul.addr %s285, 16
          %s287 = smul.addr %s286, 8
          %s288 = scalar_lea.vmem %s0, %s287
        $region52: #{tpu_custom_call.1} parent=47 // pred_fallthru
          _
      $region48: #{tpu_custom_call.1} parent=5 // pred_fallthru
        _
      %p289 = scmp.le.s32.totalorder 1, %s18
      %p290 = scmp.lt.s32.totalorder %s18, 3
      %p291 = pnand %p289, %p290
      %p292 = pneg %p291
      // Predicated region
      $region53: #{tpu_custom_call.1} parent=5 // pred_check
        _
      $region54: #{tpu_custom_call.1} parent=5 // pred_check_branch
        %294 = sbr.rel (%p291) target = $region56
      $region55: #{tpu_custom_call.1} parent=5 // pred_region
        %s295 = ssub.s32 %s18, 1
        %p296 = scmp.lt.s32.totalorder %s23, 1
        %s297 = scalar_select %p296, %s23, 1
        %s298 = smul.addr %s297, 16
        %s299 = smul.addr %s298, 8
        %s300 = scalar_lea.vmem %s0, %s299
        %p301 = pneg %p44
        %p302 = pneg %p41
        %p303 = pneg %p65
        %p304 = pneg %p62
        %p305 = pneg %p86
        %p306 = pneg %p83
        %p307 = pneg %p107
        %p308 = pneg %p104
        %p309 = pneg %p128
        %p310 = pneg %p125
        %p311 = pneg %p149
        %p312 = pneg %p146
        %p313 = pneg %p170
        %p314 = pneg %p167
        %p315 = pneg %p191
        %p316 = pneg %p188
        %p317 = pneg %p212
        %p318 = pneg %p209
        %p319 = pneg %p238
        %p320 = pneg %p235
        %s321 = sand.u32 %s225, 1
        %s322 = scalar_lea.sflag [#allocation5], %s321
        %s323 = sand.u32 %s225, 1
        %s324 = smul.addr %s323, 64
        %s325 = scalar_lea.vmem [#allocation4], %s324
        %p326 = scmp.lt.s32.totalorder %s23, 1
        %s327 = scalar_select %p326, %s23, 1
        %s328 = smul.addr %s327, 16
        %s329 = smul.addr %s328, 8
        %s330 = scalar_lea.vmem %s0, %s329
        %v331 = vld [vmem:[%s330] sm:$0xff]
        %v332 = vld [vmem:[%s330 + $0x8] sm:$0xff]
        %v333 = vld [vmem:[%s330 + $0x10] sm:$0xff]
        %v334 = vld [vmem:[%s330 + $0x18] sm:$0xff]
        %v335 = vld [vmem:[%s330 + $0x20] sm:$0xff]
        %v336 = vld [vmem:[%s330 + $0x28] sm:$0xff]
        %v337 = vld [vmem:[%s330 + $0x30] sm:$0xff]
        %v338 = vld [vmem:[%s330 + $0x38] sm:$0xff]
        %v339 = vld [vmem:[%s330 + $0x40] sm:$0xff]
        %v340 = vld [vmem:[%s330 + $0x48] sm:$0xff]
        %v341 = vld [vmem:[%s330 + $0x50] sm:$0xff]
        %v342 = vld [vmem:[%s330 + $0x58] sm:$0xff]
        %v343 = vld [vmem:[%s330 + $0x60] sm:$0xff]
        %v344 = vld [vmem:[%s330 + $0x68] sm:$0xff]
        %v345 = vld [vmem:[%s330 + $0x70] sm:$0xff]
        %v346 = vld [vmem:[%s330 + $0x78] sm:$0xff]
        %363 = vrot.lane.b32.xlu0 %v331, 124
        %v364 = vpop.permute.xlu0 %363
        %365 = vrot.lane.b32.xlu0 %v332, 124
        %v366 = vpop.permute.xlu0 %365
        %367 = vrot.lane.b32.xlu0 %v333, 124
        %v368 = vpop.permute.xlu0 %367
        %369 = vrot.lane.b32.xlu0 %v334, 124
        %v370 = vpop.permute.xlu0 %369
        %371 = vrot.lane.b32.xlu0 %v335, 124
        %v372 = vpop.permute.xlu0 %371
        %373 = vrot.lane.b32.xlu0 %v336, 124
        %v374 = vpop.permute.xlu0 %373
        %375 = vrot.lane.b32.xlu0 %v337, 124
        %v376 = vpop.permute.xlu0 %375
        %377 = vrot.lane.b32.xlu0 %v338, 124
        %v378 = vpop.permute.xlu0 %377
        %379 = vrot.lane.b32.xlu0 %v339, 124
        %v380 = vpop.permute.xlu0 %379
        %381 = vrot.lane.b32.xlu0 %v340, 124
        %v382 = vpop.permute.xlu0 %381
        %383 = vrot.lane.b32.xlu0 %v341, 124
        %v384 = vpop.permute.xlu0 %383
        %385 = vrot.lane.b32.xlu0 %v342, 124
        %v386 = vpop.permute.xlu0 %385
        %387 = vrot.lane.b32.xlu0 %v343, 124
        %v388 = vpop.permute.xlu0 %387
        %389 = vrot.lane.b32.xlu0 %v344, 124
        %v390 = vpop.permute.xlu0 %389
        %391 = vrot.lane.b32.xlu0 %v345, 124
        %v392 = vpop.permute.xlu0 %391
        %393 = vrot.lane.b32.xlu0 %v346, 124
        %v394 = vpop.permute.xlu0 %393
        %v411 = vmax.f32 %v331, %v364
        %v412 = vmax.f32 %v332, %v366
        %v413 = vmax.f32 %v333, %v368
        %v414 = vmax.f32 %v334, %v370
        %v415 = vmax.f32 %v335, %v372
        %v416 = vmax.f32 %v336, %v374
        %v417 = vmax.f32 %v337, %v376
        %v418 = vmax.f32 %v338, %v378
        %v419 = vmax.f32 %v339, %v380
        %v420 = vmax.f32 %v340, %v382
        %v421 = vmax.f32 %v341, %v384
        %v422 = vmax.f32 %v342, %v386
        %v423 = vmax.f32 %v343, %v388
        %v424 = vmax.f32 %v344, %v390
        %v425 = vmax.f32 %v345, %v392
        %v426 = vmax.f32 %v346, %v394
        %v427 = vmax.f32 %v411, %v412
        %v428 = vmax.f32 %v413, %v414
        %v429 = vmax.f32 %v415, %v416
        %v430 = vmax.f32 %v417, %v418
        %v431 = vmax.f32 %v419, %v420
        %v432 = vmax.f32 %v421, %v422
        %v433 = vmax.f32 %v423, %v424
        %v434 = vmax.f32 %v425, %v426
        %vm435 = vcmask 31744
        %436 = vst.msk [vmem:[#allocation2] sm:$0xff] %vm435, 0.0
        %vm437 = vcmask 25600
        %438 = vst.msk [vmem:[#allocation2 + $0x8] sm:$0x3] %vm437, 0.0
        %s439 = scalar_lea.vmem [#allocation2], 144
        %440 = vst.msk [vmem:[%s439] sm:$0xff] %vm435, 0.0
        %441 = vst.msk [vmem:[%s439 + $0x8] sm:$0x3] %vm437, 0.0
        %vm442 = vcmask 24576
        %443 = vst.msk [vmem:[#allocation2] sm:$0x1] %vm442, 0.0
        %444 = vst.msk [vmem:[#allocation2 + $0x10] sm:$0x1] %vm442, 0.0
        %445 = vst.msk [vmem:[#allocation2 + $0x20] sm:$0x1] %vm442, 0.0
        %446 = vst.msk [vmem:[#allocation2 + $0x30] sm:$0x1] %vm442, 0.0
        %447 = vst.msk [vmem:[#allocation2 + $0x40] sm:$0x1] %vm442, 0.0
        %448 = vst.msk [vmem:[#allocation2 + $0x50] sm:$0x1] %vm442, 0.0
        %449 = vst.msk [vmem:[#allocation2 + $0x60] sm:$0x1] %vm442, 0.0
        %450 = vst.msk [vmem:[#allocation2 + $0x70] sm:$0x1] %vm442, 0.0
        %451 = vst.msk [vmem:[#allocation2 + $0x80] sm:$0x1] %vm442, 0.0
        %452 = vst.msk [vmem:[#allocation2 + $0x90] sm:$0x1] %vm442, 0.0
        %453 = vst.msk [vmem:[#allocation2 + $0x9] sm:$0x1] %vm442, 0.0
        %454 = vst.msk [vmem:[#allocation2 + $0x19] sm:$0x1] %vm442, 0.0
        %455 = vst.msk [vmem:[#allocation2 + $0x29] sm:$0x1] %vm442, 0.0
        %456 = vst.msk [vmem:[#allocation2 + $0x39] sm:$0x1] %vm442, 0.0
        %457 = vst.msk [vmem:[#allocation2 + $0x49] sm:$0x1] %vm442, 0.0
        %458 = vst.msk [vmem:[#allocation2 + $0x59] sm:$0x1] %vm442, 0.0
        %459 = vst.msk [vmem:[#allocation2 + $0x69] sm:$0x1] %vm442, 0.0
        %460 = vst.msk [vmem:[#allocation2 + $0x79] sm:$0x1] %vm442, 0.0
        %461 = vst.msk [vmem:[#allocation2 + $0x89] sm:$0x1] %vm442, 0.0
        %462 = vst.msk [vmem:[#allocation2 + $0x99] sm:$0x1] %vm442, 0.0
        %s463 = scalar_lea.vmem [#allocation2], 16
        %464 = vst.msk [vmem:[%s463 + $0x1] sm:$0xff] %vm435, %v427
        %465 = vst.msk [vmem:[%s463 + $0x11] sm:$0xff] %vm435, %v428
        %466 = vst.msk [vmem:[%s463 + $0x21] sm:$0xff] %vm435, %v429
        %467 = vst.msk [vmem:[%s463 + $0x31] sm:$0xff] %vm435, %v430
        %468 = vst.msk [vmem:[%s463 + $0x41] sm:$0xff] %vm435, %v431
        %469 = vst.msk [vmem:[%s463 + $0x51] sm:$0xff] %vm435, %v432
        %470 = vst.msk [vmem:[%s463 + $0x61] sm:$0xff] %vm435, %v433
        %471 = vst.msk [vmem:[%s463 + $0x71] sm:$0xff] %vm435, %v434
        %v472 = vld [vmem:[#allocation2] sm:$0xff]
        %v473 = vld [vmem:[#allocation2 + $0x10] sm:$0xff]
        %v474 = vld [vmem:[#allocation2 + $0x20] sm:$0xff]
        %v475 = vld [vmem:[#allocation2 + $0x30] sm:$0xff]
        %v476 = vld [vmem:[#allocation2 + $0x40] sm:$0xff]
        %v477 = vld [vmem:[#allocation2 + $0x50] sm:$0xff]
        %v478 = vld [vmem:[#allocation2 + $0x60] sm:$0xff]
        %v479 = vld [vmem:[#allocation2 + $0x70] sm:$0xff]
        %v480 = vld [vmem:[#allocation2 + $0x1] sm:$0xff]
        %v481 = vld [vmem:[#allocation2 + $0x11] sm:$0xff]
        %v482 = vld [vmem:[#allocation2 + $0x21] sm:$0xff]
        %v483 = vld [vmem:[#allocation2 + $0x31] sm:$0xff]
        %v484 = vld [vmem:[#allocation2 + $0x41] sm:$0xff]
        %v485 = vld [vmem:[#allocation2 + $0x51] sm:$0xff]
        %v486 = vld [vmem:[#allocation2 + $0x61] sm:$0xff]
        %v487 = vld [vmem:[#allocation2 + $0x71] sm:$0xff]
        %v488 = vld [vmem:[#allocation2 + $0x2] sm:$0xff]
        %v489 = vld [vmem:[#allocation2 + $0x12] sm:$0xff]
        %v490 = vld [vmem:[#allocation2 + $0x22] sm:$0xff]
        %v491 = vld [vmem:[#allocation2 + $0x32] sm:$0xff]
        %v492 = vld [vmem:[#allocation2 + $0x42] sm:$0xff]
        %v493 = vld [vmem:[#allocation2 + $0x52] sm:$0xff]
        %v494 = vld [vmem:[#allocation2 + $0x62] sm:$0xff]
        %v495 = vld [vmem:[#allocation2 + $0x72] sm:$0xff]
        %v496 = vld [vmem:[%s463] sm:$0xff]
        %v497 = vld [vmem:[%s463 + $0x10] sm:$0xff]
        %v498 = vld [vmem:[%s463 + $0x20] sm:$0xff]
        %v499 = vld [vmem:[%s463 + $0x30] sm:$0xff]
        %v500 = vld [vmem:[%s463 + $0x40] sm:$0xff]
        %v501 = vld [vmem:[%s463 + $0x50] sm:$0xff]
        %v502 = vld [vmem:[%s463 + $0x60] sm:$0xff]
        %v503 = vld [vmem:[%s463 + $0x70] sm:$0xff]
        %v504 = vld [vmem:[%s463 + $0x1] sm:$0xff]
        %v505 = vld [vmem:[%s463 + $0x11] sm:$0xff]
        %v506 = vld [vmem:[%s463 + $0x21] sm:$0xff]
        %v507 = vld [vmem:[%s463 + $0x31] sm:$0xff]
        %v508 = vld [vmem:[%s463 + $0x41] sm:$0xff]
        %v509 = vld [vmem:[%s463 + $0x51] sm:$0xff]
        %v510 = vld [vmem:[%s463 + $0x61] sm:$0xff]
        %v511 = vld [vmem:[%s463 + $0x71] sm:$0xff]
        %v512 = vld [vmem:[%s463 + $0x2] sm:$0xff]
        %v513 = vld [vmem:[%s463 + $0x12] sm:$0xff]
        %v514 = vld [vmem:[%s463 + $0x22] sm:$0xff]
        %v515 = vld [vmem:[%s463 + $0x32] sm:$0xff]
        %v516 = vld [vmem:[%s463 + $0x42] sm:$0xff]
        %v517 = vld [vmem:[%s463 + $0x52] sm:$0xff]
        %v518 = vld [vmem:[%s463 + $0x62] sm:$0xff]
        %v519 = vld [vmem:[%s463 + $0x72] sm:$0xff]
        %s520 = scalar_lea.vmem [#allocation2], 32
        %v521 = vld [vmem:[%s520] sm:$0xff]
        %v522 = vld [vmem:[%s520 + $0x10] sm:$0xff]
        %v523 = vld [vmem:[%s520 + $0x20] sm:$0xff]
        %v524 = vld [vmem:[%s520 + $0x30] sm:$0xff]
        %v525 = vld [vmem:[%s520 + $0x40] sm:$0xff]
        %v526 = vld [vmem:[%s520 + $0x50] sm:$0xff]
        %v527 = vld [vmem:[%s520 + $0x60] sm:$0xff]
        %v528 = vld [vmem:[%s520 + $0x70] sm:$0xff]
        %v529 = vld [vmem:[%s520 + $0x1] sm:$0xff]
        %v530 = vld [vmem:[%s520 + $0x11] sm:$0xff]
        %v531 = vld [vmem:[%s520 + $0x21] sm:$0xff]
        %v532 = vld [vmem:[%s520 + $0x31] sm:$0xff]
        %v533 = vld [vmem:[%s520 + $0x41] sm:$0xff]
        %v534 = vld [vmem:[%s520 + $0x51] sm:$0xff]
        %v535 = vld [vmem:[%s520 + $0x61] sm:$0xff]
        %v536 = vld [vmem:[%s520 + $0x71] sm:$0xff]
        %v537 = vld [vmem:[%s520 + $0x2] sm:$0xff]
        %v538 = vld [vmem:[%s520 + $0x12] sm:$0xff]
        %v539 = vld [vmem:[%s520 + $0x22] sm:$0xff]
        %v540 = vld [vmem:[%s520 + $0x32] sm:$0xff]
        %v541 = vld [vmem:[%s520 + $0x42] sm:$0xff]
        %v542 = vld [vmem:[%s520 + $0x52] sm:$0xff]
        %v543 = vld [vmem:[%s520 + $0x62] sm:$0xff]
        %v544 = vld [vmem:[%s520 + $0x72] sm:$0xff]
        %553 = vrot.lane.b32.xlu0 %v480, 4
        %v554 = vpop.permute.xlu0 %553
        %555 = vrot.lane.b32.xlu0 %v481, 4
        %v556 = vpop.permute.xlu0 %555
        %557 = vrot.lane.b32.xlu0 %v482, 4
        %v558 = vpop.permute.xlu0 %557
        %559 = vrot.lane.b32.xlu0 %v483, 4
        %v560 = vpop.permute.xlu0 %559
        %561 = vrot.lane.b32.xlu0 %v484, 4
        %v562 = vpop.permute.xlu0 %561
        %563 = vrot.lane.b32.xlu0 %v485, 4
        %v564 = vpop.permute.xlu0 %563
        %565 = vrot.lane.b32.xlu0 %v486, 4
        %v566 = vpop.permute.xlu0 %565
        %567 = vrot.lane.b32.xlu0 %v487, 4
        %v568 = vpop.permute.xlu0 %567
        %585 = vrot.lane.b32.xlu0 %v488, 8
        %v586 = vpop.permute.xlu0 %585
        %587 = vrot.lane.b32.xlu0 %v489, 8
        %v588 = vpop.permute.xlu0 %587
        %589 = vrot.lane.b32.xlu0 %v490, 8
        %v590 = vpop.permute.xlu0 %589
        %591 = vrot.lane.b32.xlu0 %v491, 8
        %v592 = vpop.permute.xlu0 %591
        %593 = vrot.lane.b32.xlu0 %v492, 8
        %v594 = vpop.permute.xlu0 %593
        %595 = vrot.lane.b32.xlu0 %v493, 8
        %v596 = vpop.permute.xlu0 %595
        %597 = vrot.lane.b32.xlu0 %v494, 8
        %v598 = vpop.permute.xlu0 %597
        %599 = vrot.lane.b32.xlu0 %v495, 8
        %v600 = vpop.permute.xlu0 %599
        %617 = vrot.lane.b32.xlu0 %v496, 12
        %v618 = vpop.permute.xlu0 %617
        %619 = vrot.lane.b32.xlu0 %v497, 12
        %v620 = vpop.permute.xlu0 %619
        %621 = vrot.lane.b32.xlu0 %v498, 12
        %v622 = vpop.permute.xlu0 %621
        %623 = vrot.lane.b32.xlu0 %v499, 12
        %v624 = vpop.permute.xlu0 %623
        %625 = vrot.lane.b32.xlu0 %v500, 12
        %v626 = vpop.permute.xlu0 %625
        %627 = vrot.lane.b32.xlu0 %v501, 12
        %v628 = vpop.permute.xlu0 %627
        %629 = vrot.lane.b32.xlu0 %v502, 12
        %v630 = vpop.permute.xlu0 %629
        %631 = vrot.lane.b32.xlu0 %v503, 12
        %v632 = vpop.permute.xlu0 %631
        %649 = vrot.lane.b32.xlu0 %v504, 16
        %v650 = vpop.permute.xlu0 %649
        %651 = vrot.lane.b32.xlu0 %v505, 16
        %v652 = vpop.permute.xlu0 %651
        %653 = vrot.lane.b32.xlu0 %v506, 16
        %v654 = vpop.permute.xlu0 %653
        %655 = vrot.lane.b32.xlu0 %v507, 16
        %v656 = vpop.permute.xlu0 %655
        %657 = vrot.lane.b32.xlu0 %v508, 16
        %v658 = vpop.permute.xlu0 %657
        %659 = vrot.lane.b32.xlu0 %v509, 16
        %v660 = vpop.permute.xlu0 %659
        %661 = vrot.lane.b32.xlu0 %v510, 16
        %v662 = vpop.permute.xlu0 %661
        %663 = vrot.lane.b32.xlu0 %v511, 16
        %v664 = vpop.permute.xlu0 %663
        %681 = vrot.lane.b32.xlu0 %v512, 20
        %v682 = vpop.permute.xlu0 %681
        %683 = vrot.lane.b32.xlu0 %v513, 20
        %v684 = vpop.permute.xlu0 %683
        %685 = vrot.lane.b32.xlu0 %v514, 20
        %v686 = vpop.permute.xlu0 %685
        %687 = vrot.lane.b32.xlu0 %v515, 20
        %v688 = vpop.permute.xlu0 %687
        %689 = vrot.lane.b32.xlu0 %v516, 20
        %v690 = vpop.permute.xlu0 %689
        %691 = vrot.lane.b32.xlu0 %v517, 20
        %v692 = vpop.permute.xlu0 %691
        %693 = vrot.lane.b32.xlu0 %v518, 20
        %v694 = vpop.permute.xlu0 %693
        %695 = vrot.lane.b32.xlu0 %v519, 20
        %v696 = vpop.permute.xlu0 %695
        %713 = vrot.lane.b32.xlu0 %v521, 24
        %v714 = vpop.permute.xlu0 %713
        %715 = vrot.lane.b32.xlu0 %v522, 24
        %v716 = vpop.permute.xlu0 %715
        %717 = vrot.lane.b32.xlu0 %v523, 24
        %v718 = vpop.permute.xlu0 %717
        %719 = vrot.lane.b32.xlu0 %v524, 24
        %v720 = vpop.permute.xlu0 %719
        %721 = vrot.lane.b32.xlu0 %v525, 24
        %v722 = vpop.permute.xlu0 %721
        %723 = vrot.lane.b32.xlu0 %v526, 24
        %v724 = vpop.permute.xlu0 %723
        %725 = vrot.lane.b32.xlu0 %v527, 24
        %v726 = vpop.permute.xlu0 %725
        %727 = vrot.lane.b32.xlu0 %v528, 24
        %v728 = vpop.permute.xlu0 %727
        %745 = vrot.lane.b32.xlu0 %v529, 28
        %v746 = vpop.permute.xlu0 %745
        %747 = vrot.lane.b32.xlu0 %v530, 28
        %v748 = vpop.permute.xlu0 %747
        %749 = vrot.lane.b32.xlu0 %v531, 28
        %v750 = vpop.permute.xlu0 %749
        %751 = vrot.lane.b32.xlu0 %v532, 28
        %v752 = vpop.permute.xlu0 %751
        %753 = vrot.lane.b32.xlu0 %v533, 28
        %v754 = vpop.permute.xlu0 %753
        %755 = vrot.lane.b32.xlu0 %v534, 28
        %v756 = vpop.permute.xlu0 %755
        %757 = vrot.lane.b32.xlu0 %v535, 28
        %v758 = vpop.permute.xlu0 %757
        %759 = vrot.lane.b32.xlu0 %v536, 28
        %v760 = vpop.permute.xlu0 %759
        %777 = vrot.lane.b32.xlu0 %v537, 32
        %v778 = vpop.permute.xlu0 %777
        %779 = vrot.lane.b32.xlu0 %v538, 32
        %v780 = vpop.permute.xlu0 %779
        %781 = vrot.lane.b32.xlu0 %v539, 32
        %v782 = vpop.permute.xlu0 %781
        %783 = vrot.lane.b32.xlu0 %v540, 32
        %v784 = vpop.permute.xlu0 %783
        %785 = vrot.lane.b32.xlu0 %v541, 32
        %v786 = vpop.permute.xlu0 %785
        %787 = vrot.lane.b32.xlu0 %v542, 32
        %v788 = vpop.permute.xlu0 %787
        %789 = vrot.lane.b32.xlu0 %v543, 32
        %v790 = vpop.permute.xlu0 %789
        %791 = vrot.lane.b32.xlu0 %v544, 32
        %v792 = vpop.permute.xlu0 %791
        %v801 = vsel %vm435, %v472, %v554
        %v802 = vsel %vm435, %v473, %v556
        %v803 = vsel %vm435, %v474, %v558
        %v804 = vsel %vm435, %v475, %v560
        %v805 = vsel %vm435, %v476, %v562
        %v806 = vsel %vm435, %v477, %v564
        %v807 = vsel %vm435, %v478, %v566
        %v808 = vsel %vm435, %v479, %v568
        %vm809 = vcmask 64512
        %v810 = vsel %vm809, %v801, %v586
        %v811 = vsel %vm809, %v802, %v588
        %v812 = vsel %vm809, %v803, %v590
        %v813 = vsel %vm809, %v804, %v592
        %v814 = vsel %vm809, %v805, %v594
        %v815 = vsel %vm809, %v806, %v596
        %v816 = vsel %vm809, %v807, %v598
        %v817 = vsel %vm809, %v808, %v600
        %vm818 = vcmask 97280
        %v819 = vsel %vm818, %v810, %v618
        %v820 = vsel %vm818, %v811, %v620
        %v821 = vsel %vm818, %v812, %v622
        %v822 = vsel %vm818, %v813, %v624
        %v823 = vsel %vm818, %v814, %v626
        %v824 = vsel %vm818, %v815, %v628
        %v825 = vsel %vm818, %v816, %v630
        %v826 = vsel %vm818, %v817, %v632
        %vm827 = vcmask 130048
        %v828 = vsel %vm827, %v819, %v650
        %v829 = vsel %vm827, %v820, %v652
        %v830 = vsel %vm827, %v821, %v654
        %v831 = vsel %vm827, %v822, %v656
        %v832 = vsel %vm827, %v823, %v658
        %v833 = vsel %vm827, %v824, %v660
        %v834 = vsel %vm827, %v825, %v662
        %v835 = vsel %vm827, %v826, %v664
        %vm836 = vcmask 162816
        %v837 = vsel %vm836, %v828, %v682
        %v838 = vsel %vm836, %v829, %v684
        %v839 = vsel %vm836, %v830, %v686
        %v840 = vsel %vm836, %v831, %v688
        %v841 = vsel %vm836, %v832, %v690
        %v842 = vsel %vm836, %v833, %v692
        %v843 = vsel %vm836, %v834, %v694
        %v844 = vsel %vm836, %v835, %v696
        %vm845 = vcmask 195584
        %v846 = vsel %vm845, %v837, %v714
        %v847 = vsel %vm845, %v838, %v716
        %v848 = vsel %vm845, %v839, %v718
        %v849 = vsel %vm845, %v840, %v720
        %v850 = vsel %vm845, %v841, %v722
        %v851 = vsel %vm845, %v842, %v724
        %v852 = vsel %vm845, %v843, %v726
        %v853 = vsel %vm845, %v844, %v728
        %vm854 = vcmask 228352
        %v855 = vsel %vm854, %v846, %v746
        %v856 = vsel %vm854, %v847, %v748
        %v857 = vsel %vm854, %v848, %v750
        %v858 = vsel %vm854, %v849, %v752
        %v859 = vsel %vm854, %v850, %v754
        %v860 = vsel %vm854, %v851, %v756
        %v861 = vsel %vm854, %v852, %v758
        %v862 = vsel %vm854, %v853, %v760
        %vm863 = vcmask 261120
        %v864 = vsel %vm863, %v855, %v778
        %v865 = vsel %vm863, %v856, %v780
        %v866 = vsel %vm863, %v857, %v782
        %v867 = vsel %vm863, %v858, %v784
        %v868 = vsel %vm863, %v859, %v786
        %v869 = vsel %vm863, %v860, %v788
        %v870 = vsel %vm863, %v861, %v790
        %v871 = vsel %vm863, %v862, %v792
        %v872 = vld [vmem:[%s1] sm:$0xff]
        %v873 = vld [vmem:[%s1 + $0x8] sm:$0xff]
        %v874 = vld [vmem:[%s1 + $0x10] sm:$0xff]
        %v875 = vld [vmem:[%s1 + $0x18] sm:$0xff]
        %v876 = vld [vmem:[%s1 + $0x20] sm:$0xf]
        %v877 = vld [vmem:[%s2] sm:$0x1]
        %v879 = vlaneseq
        %v880 = vshrl.u32 %v879, 7
        %v881 = vsub.s32 0, %v880
        %v882 = vrot.slane %v877, %v881
        %vm884 = vcmask 293888
        %v886 = vsel %vm884, %v864, 0
        %v889 = vsel %vm884, %v865, 0
        %v892 = vsel %vm884, %v866, 0
        %v895 = vsel %vm884, %v867, 0
        %v898 = vsel %vm884, %v868, 0
        %v901 = vsel %vm884, %v869, 0
        %v904 = vsel %vm884, %v870, 0
        %v907 = vsel %vm884, %v871, 0
        %vm909 = vcmask 1043456
        %v911 = vsel %vm909, %v876, 0
        %913 = vmatprep.subr.mxu0 0.0
        %914 = vmatpush1.msra.mxu0 %v872
        %915 = vmatprep.subr.mxu0 0.0
        %916 = vmatpush1.msra.mxu0 %v873
        %917 = vmatprep.subr.mxu0 0.0
        %918 = vmatpush1.msra.mxu0 %v874
        %919 = vmatprep.subr.mxu0 0.0
        %920 = vmatpush1.msra.mxu0 %v875
        %921 = vmatprep.subr.mxu0 0.0
        %922 = vmatpush1.msra.mxu0 %v911
        %923 = vmatprep.subr.mxu0 0.0
        %924 = vmatpush1.msra.mxu0 0.0
        %925 = vmatprep.subr.mxu0 0.0
        %926 = vmatpush1.msra.mxu0 0.0
        %927 = vmatprep.subr.mxu0 0.0
        %928 = vmatpush1.msra.mxu0 0.0
        %929 = vmatprep.subr.mxu0 0.0
        %930 = vmatpush1.msra.mxu0 0.0
        %931 = vmatprep.subr.mxu0 0.0
        %932 = vmatpush1.msra.mxu0 0.0
        %933 = vmatprep.subr.mxu0 0.0
        %934 = vmatpush1.msra.mxu0 0.0
        %935 = vmatprep.subr.mxu0 0.0
        %936 = vmatpush1.msra.mxu0 0.0
        %937 = vmatprep.subr.mxu0 0.0
        %938 = vmatpush1.msra.mxu0 0.0
        %939 = vmatprep.subr.mxu0 0.0
        %940 = vmatpush1.msra.mxu0 0.0
        %941 = vmatprep.subr.mxu0 0.0
        %942 = vmatpush1.msra.mxu0 0.0
        %943 = vmatprep.subr.mxu0 0.0
        %944 = vmatpush1.msra.mxu0 0.0
        %945 = vmatprep.subr.mxu0 0.0
        %946 = vmatpush1.msra.mxu0 0.0
        %947 = vmatprep.subr.mxu0 0.0
        %948 = vmatpush1.msra.mxu0 0.0
        %949 = vmatprep.subr.mxu0 0.0
        %950 = vmatpush1.msra.mxu0 0.0
        %951 = vmatprep.subr.mxu0 0.0
        %952 = vmatpush1.msra.mxu0 0.0
        %953 = vmatprep.subr.mxu0 0.0
        %954 = vmatpush1.msra.mxu0 0.0
        %955 = vmatprep.subr.mxu0 0.0
        %956 = vmatpush1.msra.mxu0 0.0
        %957 = vmatprep.subr.mxu0 0.0
        %958 = vmatpush1.msra.mxu0 0.0
        %959 = vmatprep.subr.mxu0 0.0
        %960 = vmatpush1.msra.mxu0 0.0
        %961 = vmatprep.subr.mxu0 0.0
        %962 = vmatpush1.msra.mxu0 0.0
        %963 = vmatprep.subr.mxu0 0.0
        %964 = vmatpush1.msra.mxu0 0.0
        %965 = vmatprep.subr.mxu0 0.0
        %966 = vmatpush1.msra.mxu0 0.0
        %967 = vmatprep.subr.mxu0 0.0
        %968 = vmatpush1.msra.mxu0 0.0
        %969 = vmatprep.subr.mxu0 0.0
        %970 = vmatpush1.msra.mxu0 0.0
        %971 = vmatprep.subr.mxu0 0.0
        %972 = vmatpush1.msra.mxu0 0.0
        %973 = vmatprep.subr.mxu0 0.0
        %974 = vmatpush1.msra.mxu0 0.0
        %975 = vmatprep.subr.mxu0 0.0
        %976 = vmatpush1.msra.mxu0 0.0
        %977 = vmatprep.mubr.f32.mxu0 0.0
        %978 = vmatmul.mubr.f32.gmra.mrb[0].mxu0 %v886
        %v979 = vpop.f32.mrb[0].mxu0
        %v980 = vadd.f32 %v882, %v979
        %v981 = vpop.f32.mrb[0].mxu0
        %982 = vmatprep.mubr.f32.mxu0 0.0
        %983 = vmatmul.mubr.f32.gmra.mrb[0].mxu0 %v889
        %v984 = vpop.f32.mrb[0].mxu0
        %v985 = vadd.f32 %v882, %v984
        %v986 = vpop.f32.mrb[0].mxu0
        %987 = vmatprep.mubr.f32.mxu0 0.0
        %988 = vmatmul.mubr.f32.gmra.mrb[0].mxu0 %v892
        %v989 = vpop.f32.mrb[0].mxu0
        %v990 = vadd.f32 %v882, %v989
        %v991 = vpop.f32.mrb[0].mxu0
        %992 = vmatprep.mubr.f32.mxu0 0.0
        %993 = vmatmul.mubr.f32.gmra.mrb[0].mxu0 %v895
        %v994 = vpop.f32.mrb[0].mxu0
        %v995 = vadd.f32 %v882, %v994
        %v996 = vpop.f32.mrb[0].mxu0
        %997 = vmatprep.mubr.f32.mxu0 0.0
        %998 = vmatmul.mubr.f32.gmra.mrb[0].mxu0 %v898
        %v999 = vpop.f32.mrb[0].mxu0
        %v1000 = vadd.f32 %v882, %v999
        %v1001 = vpop.f32.mrb[0].mxu0
        %1002 = vmatprep.mubr.f32.mxu0 0.0
        %1003 = vmatmul.mubr.f32.gmra.mrb[0].mxu0 %v901
        %v1004 = vpop.f32.mrb[0].mxu0
        %v1005 = vadd.f32 %v882, %v1004
        %v1006 = vpop.f32.mrb[0].mxu0
        %1007 = vmatprep.mubr.f32.mxu0 0.0
        %1008 = vmatmul.mubr.f32.gmra.mrb[0].mxu0 %v904
        %v1009 = vpop.f32.mrb[0].mxu0
        %v1010 = vadd.f32 %v882, %v1009
        %v1011 = vpop.f32.mrb[0].mxu0
        %1012 = vmatprep.mubr.f32.mxu0 0.0
        %1013 = vmatmul.mubr.f32.gmra.mrb[0].mxu0 %v907
        %v1014 = vpop.f32.mrb[0].mxu0
        %v1015 = vadd.f32 %v882, %v1014
        %v1016 = vpop.f32.mrb[0].mxu0
        %1017 = vdwg.mxu0
        %v1018 = vadd.f32 %v980, %v985
        %v1019 = vadd.f32 %v1018, %v990
        %v1020 = vadd.f32 %v1019, %v995
        %v1021 = vadd.f32 %v1020, %v1000
        %v1022 = vadd.f32 %v1021, %v1005
        %v1023 = vadd.f32 %v1022, %v1010
        %v1024 = vadd.f32 %v1023, %v1015
        %v1025 = vrot.slane %v1024, 4
        %v1026 = vadd.f32 %v1024, %v1025
        %v1027 = vrot.slane %v1026, 2
        %v1028 = vadd.f32 %v1026, %v1027
        %v1029 = vrot.slane %v1028, 1
        %v1030 = vadd.f32 %v1028, %v1029
        %v1031 = vrcp.pop 64.0
        %v1032 = vmul.f32 %v1030, %v1031
        %v1033 = vsub.f32 %v980, %v1032
        %v1034 = vsub.f32 %v985, %v1032
        %v1035 = vsub.f32 %v990, %v1032
        %v1036 = vsub.f32 %v995, %v1032
        %v1037 = vsub.f32 %v1000, %v1032
        %v1038 = vsub.f32 %v1005, %v1032
        %v1039 = vsub.f32 %v1010, %v1032
        %v1040 = vsub.f32 %v1015, %v1032
        %v1041 = vmul.f32 %v1033, %v1033
        %v1042 = vmul.f32 %v1034, %v1034
        %v1043 = vmul.f32 %v1035, %v1035
        %v1044 = vmul.f32 %v1036, %v1036
        %v1045 = vmul.f32 %v1037, %v1037
        %v1046 = vmul.f32 %v1038, %v1038
        %v1047 = vmul.f32 %v1039, %v1039
        %v1048 = vmul.f32 %v1040, %v1040
        %v1049 = vadd.f32 %v1041, %v1042
        %v1050 = vadd.f32 %v1049, %v1043
        %v1051 = vadd.f32 %v1050, %v1044
        %v1052 = vadd.f32 %v1051, %v1045
        %v1053 = vadd.f32 %v1052, %v1046
        %v1054 = vadd.f32 %v1053, %v1047
        %v1055 = vadd.f32 %v1054, %v1048
        %v1056 = vrot.slane %v1055, 4
        %v1057 = vadd.f32 %v1055, %v1056
        %v1058 = vrot.slane %v1057, 2
        %v1059 = vadd.f32 %v1057, %v1058
        %v1060 = vrot.slane %v1059, 1
        %v1061 = vadd.f32 %v1059, %v1060
        %v1062 = vmul.f32 %v1061, %v1031
        %v1063 = vadd.f32 %v1062, 1e-05
        %v1064 = vrsqrt.pop %v1063
        %v1065 = vmul.f32 %v1033, %v1064
        %v1066 = vmul.f32 %v1034, %v1064
        %v1067 = vmul.f32 %v1035, %v1064
        %v1068 = vmul.f32 %v1036, %v1064
        %v1069 = vmul.f32 %v1037, %v1064
        %v1070 = vmul.f32 %v1038, %v1064
        %v1071 = vmul.f32 %v1039, %v1064
        %v1072 = vmul.f32 %v1040, %v1064
        %v1073 = vmax.f32 %v1065, 0.0
        %v1074 = vmax.f32 %v1066, 0.0
        %v1075 = vmax.f32 %v1067, 0.0
        %v1076 = vmax.f32 %v1068, 0.0
        %v1077 = vmax.f32 %v1069, 0.0
        %v1078 = vmax.f32 %v1070, 0.0
        %v1079 = vmax.f32 %v1071, 0.0
        %v1080 = vmax.f32 %v1072, 0.0
        %1081 = vst.msk [vmem:[#allocation3] sm:$0xff] %vm809, 0.0
        %vm1082 = vcmask 58368
        %1083 = vst.msk [vmem:[#allocation3 + $0x8] sm:$0x3] %vm1082, 0.0
        %s1084 = scalar_lea.vmem [#allocation3], 144
        %1085 = vst.msk [vmem:[%s1084] sm:$0xff] %vm809, 0.0
        %1086 = vst.msk [vmem:[%s1084 + $0x8] sm:$0x3] %vm1082, 0.0
        %vm1087 = vcmask 57344
        %1088 = vst.msk [vmem:[#allocation3] sm:$0x1] %vm1087, 0.0
        %1089 = vst.msk [vmem:[#allocation3 + $0x10] sm:$0x1] %vm1087, 0.0
        %1090 = vst.msk [vmem:[#allocation3 + $0x20] sm:$0x1] %vm1087, 0.0
        %1091 = vst.msk [vmem:[#allocation3 + $0x30] sm:$0x1] %vm1087, 0.0
        %1092 = vst.msk [vmem:[#allocation3 + $0x40] sm:$0x1] %vm1087, 0.0
        %1093 = vst.msk [vmem:[#allocation3 + $0x50] sm:$0x1] %vm1087, 0.0
        %1094 = vst.msk [vmem:[#allocation3 + $0x60] sm:$0x1] %vm1087, 0.0
        %1095 = vst.msk [vmem:[#allocation3 + $0x70] sm:$0x1] %vm1087, 0.0
        %1096 = vst.msk [vmem:[#allocation3 + $0x80] sm:$0x1] %vm1087, 0.0
        %1097 = vst.msk [vmem:[#allocation3 + $0x90] sm:$0x1] %vm1087, 0.0
        %1098 = vst.msk [vmem:[#allocation3 + $0x9] sm:$0x1] %vm1087, 0.0
        %1099 = vst.msk [vmem:[#allocation3 + $0x19] sm:$0x1] %vm1087, 0.0
        %1100 = vst.msk [vmem:[#allocation3 + $0x29] sm:$0x1] %vm1087, 0.0
        %1101 = vst.msk [vmem:[#allocation3 + $0x39] sm:$0x1] %vm1087, 0.0
        %1102 = vst.msk [vmem:[#allocation3 + $0x49] sm:$0x1] %vm1087, 0.0
        %1103 = vst.msk [vmem:[#allocation3 + $0x59] sm:$0x1] %vm1087, 0.0
        %1104 = vst.msk [vmem:[#allocation3 + $0x69] sm:$0x1] %vm1087, 0.0
        %1105 = vst.msk [vmem:[#allocation3 + $0x79] sm:$0x1] %vm1087, 0.0
        %1106 = vst.msk [vmem:[#allocation3 + $0x89] sm:$0x1] %vm1087, 0.0
        %1107 = vst.msk [vmem:[#allocation3 + $0x99] sm:$0x1] %vm1087, 0.0
        %s1108 = scalar_lea.vmem [#allocation3], 16
        %1109 = vst.msk [vmem:[%s1108 + $0x1] sm:$0xff] %vm809, %v1073
        %1110 = vst.msk [vmem:[%s1108 + $0x11] sm:$0xff] %vm809, %v1074
        %1111 = vst.msk [vmem:[%s1108 + $0x21] sm:$0xff] %vm809, %v1075
        %1112 = vst.msk [vmem:[%s1108 + $0x31] sm:$0xff] %vm809, %v1076
        %1113 = vst.msk [vmem:[%s1108 + $0x41] sm:$0xff] %vm809, %v1077
        %1114 = vst.msk [vmem:[%s1108 + $0x51] sm:$0xff] %vm809, %v1078
        %1115 = vst.msk [vmem:[%s1108 + $0x61] sm:$0xff] %vm809, %v1079
        %1116 = vst.msk [vmem:[%s1108 + $0x71] sm:$0xff] %vm809, %v1080
        %v1117 = vld [vmem:[#allocation3] sm:$0xff]
        %v1118 = vld [vmem:[#allocation3 + $0x10] sm:$0xff]
        %v1119 = vld [vmem:[#allocation3 + $0x20] sm:$0xff]
        %v1120 = vld [vmem:[#allocation3 + $0x30] sm:$0xff]
        %v1121 = vld [vmem:[#allocation3 + $0x40] sm:$0xff]
        %v1122 = vld [vmem:[#allocation3 + $0x50] sm:$0xff]
        %v1123 = vld [vmem:[#allocation3 + $0x60] sm:$0xff]
        %v1124 = vld [vmem:[#allocation3 + $0x70] sm:$0xff]
        %v1125 = vld [vmem:[#allocation3 + $0x1] sm:$0xff]
        %v1126 = vld [vmem:[#allocation3 + $0x11] sm:$0xff]
        %v1127 = vld [vmem:[#allocation3 + $0x21] sm:$0xff]
        %v1128 = vld [vmem:[#allocation3 + $0x31] sm:$0xff]
        %v1129 = vld [vmem:[#allocation3 + $0x41] sm:$0xff]
        %v1130 = vld [vmem:[#allocation3 + $0x51] sm:$0xff]
        %v1131 = vld [vmem:[#allocation3 + $0x61] sm:$0xff]
        %v1132 = vld [vmem:[#allocation3 + $0x71] sm:$0xff]
        %v1133 = vld [vmem:[#allocation3 + $0x2] sm:$0xff]
        %v1134 = vld [vmem:[#allocation3 + $0x12] sm:$0xff]
        %v1135 = vld [vmem:[#allocation3 + $0x22] sm:$0xff]
        %v1136 = vld [vmem:[#allocation3 + $0x32] sm:$0xff]
        %v1137 = vld [vmem:[#allocation3 + $0x42] sm:$0xff]
        %v1138 = vld [vmem:[#allocation3 + $0x52] sm:$0xff]
        %v1139 = vld [vmem:[#allocation3 + $0x62] sm:$0xff]
        %v1140 = vld [vmem:[#allocation3 + $0x72] sm:$0xff]
        %v1141 = vld [vmem:[%s1108] sm:$0xff]
        %v1142 = vld [vmem:[%s1108 + $0x10] sm:$0xff]
        %v1143 = vld [vmem:[%s1108 + $0x20] sm:$0xff]
        %v1144 = vld [vmem:[%s1108 + $0x30] sm:$0xff]
        %v1145 = vld [vmem:[%s1108 + $0x40] sm:$0xff]
        %v1146 = vld [vmem:[%s1108 + $0x50] sm:$0xff]
        %v1147 = vld [vmem:[%s1108 + $0x60] sm:$0xff]
        %v1148 = vld [vmem:[%s1108 + $0x70] sm:$0xff]
        %v1149 = vld [vmem:[%s1108 + $0x1] sm:$0xff]
        %v1150 = vld [vmem:[%s1108 + $0x11] sm:$0xff]
        %v1151 = vld [vmem:[%s1108 + $0x21] sm:$0xff]
        %v1152 = vld [vmem:[%s1108 + $0x31] sm:$0xff]
        %v1153 = vld [vmem:[%s1108 + $0x41] sm:$0xff]
        %v1154 = vld [vmem:[%s1108 + $0x51] sm:$0xff]
        %v1155 = vld [vmem:[%s1108 + $0x61] sm:$0xff]
        %v1156 = vld [vmem:[%s1108 + $0x71] sm:$0xff]
        %v1157 = vld [vmem:[%s1108 + $0x2] sm:$0xff]
        %v1158 = vld [vmem:[%s1108 + $0x12] sm:$0xff]
        %v1159 = vld [vmem:[%s1108 + $0x22] sm:$0xff]
        %v1160 = vld [vmem:[%s1108 + $0x32] sm:$0xff]
        %v1161 = vld [vmem:[%s1108 + $0x42] sm:$0xff]
        %v1162 = vld [vmem:[%s1108 + $0x52] sm:$0xff]
        %v1163 = vld [vmem:[%s1108 + $0x62] sm:$0xff]
        %v1164 = vld [vmem:[%s1108 + $0x72] sm:$0xff]
        %s1165 = scalar_lea.vmem [#allocation3], 32
        %v1166 = vld [vmem:[%s1165] sm:$0xff]
        %v1167 = vld [vmem:[%s1165 + $0x10] sm:$0xff]
        %v1168 = vld [vmem:[%s1165 + $0x20] sm:$0xff]
        %v1169 = vld [vmem:[%s1165 + $0x30] sm:$0xff]
        %v1170 = vld [vmem:[%s1165 + $0x40] sm:$0xff]
        %v1171 = vld [vmem:[%s1165 + $0x50] sm:$0xff]
        %v1172 = vld [vmem:[%s1165 + $0x60] sm:$0xff]
        %v1173 = vld [vmem:[%s1165 + $0x70] sm:$0xff]
        %v1174 = vld [vmem:[%s1165 + $0x1] sm:$0xff]
        %v1175 = vld [vmem:[%s1165 + $0x11] sm:$0xff]
        %v1176 = vld [vmem:[%s1165 + $0x21] sm:$0xff]
        %v1177 = vld [vmem:[%s1165 + $0x31] sm:$0xff]
        %v1178 = vld [vmem:[%s1165 + $0x41] sm:$0xff]
        %v1179 = vld [vmem:[%s1165 + $0x51] sm:$0xff]
        %v1180 = vld [vmem:[%s1165 + $0x61] sm:$0xff]
        %v1181 = vld [vmem:[%s1165 + $0x71] sm:$0xff]
        %v1182 = vld [vmem:[%s1165 + $0x2] sm:$0xff]
        %v1183 = vld [vmem:[%s1165 + $0x12] sm:$0xff]
        %v1184 = vld [vmem:[%s1165 + $0x22] sm:$0xff]
        %v1185 = vld [vmem:[%s1165 + $0x32] sm:$0xff]
        %v1186 = vld [vmem:[%s1165 + $0x42] sm:$0xff]
        %v1187 = vld [vmem:[%s1165 + $0x52] sm:$0xff]
        %v1188 = vld [vmem:[%s1165 + $0x62] sm:$0xff]
        %v1189 = vld [vmem:[%s1165 + $0x72] sm:$0xff]
        %1198 = vrot.lane.b32.xlu0 %v1125, 8
        %v1199 = vpop.permute.xlu0 %1198
        %1200 = vrot.lane.b32.xlu0 %v1126, 8
        %v1201 = vpop.permute.xlu0 %1200
        %1202 = vrot.lane.b32.xlu0 %v1127, 8
        %v1203 = vpop.permute.xlu0 %1202
        %1204 = vrot.lane.b32.xlu0 %v1128, 8
        %v1205 = vpop.permute.xlu0 %1204
        %1206 = vrot.lane.b32.xlu0 %v1129, 8
        %v1207 = vpop.permute.xlu0 %1206
        %1208 = vrot.lane.b32.xlu0 %v1130, 8
        %v1209 = vpop.permute.xlu0 %1208
        %1210 = vrot.lane.b32.xlu0 %v1131, 8
        %v1211 = vpop.permute.xlu0 %1210
        %1212 = vrot.lane.b32.xlu0 %v1132, 8
        %v1213 = vpop.permute.xlu0 %1212
        %1230 = vrot.lane.b32.xlu0 %v1133, 16
        %v1231 = vpop.permute.xlu0 %1230
        %1232 = vrot.lane.b32.xlu0 %v1134, 16
        %v1233 = vpop.permute.xlu0 %1232
        %1234 = vrot.lane.b32.xlu0 %v1135, 16
        %v1235 = vpop.permute.xlu0 %1234
        %1236 = vrot.lane.b32.xlu0 %v1136, 16
        %v1237 = vpop.permute.xlu0 %1236
        %1238 = vrot.lane.b32.xlu0 %v1137, 16
        %v1239 = vpop.permute.xlu0 %1238
        %1240 = vrot.lane.b32.xlu0 %v1138, 16
        %v1241 = vpop.permute.xlu0 %1240
        %1242 = vrot.lane.b32.xlu0 %v1139, 16
        %v1243 = vpop.permute.xlu0 %1242
        %1244 = vrot.lane.b32.xlu0 %v1140, 16
        %v1245 = vpop.permute.xlu0 %1244
        %1262 = vrot.lane.b32.xlu0 %v1141, 24
        %v1263 = vpop.permute.xlu0 %1262
        %1264 = vrot.lane.b32.xlu0 %v1142, 24
        %v1265 = vpop.permute.xlu0 %1264
        %1266 = vrot.lane.b32.xlu0 %v1143, 24
        %v1267 = vpop.permute.xlu0 %1266
        %1268 = vrot.lane.b32.xlu0 %v1144, 24
        %v1269 = vpop.permute.xlu0 %1268
        %1270 = vrot.lane.b32.xlu0 %v1145, 24
        %v1271 = vpop.permute.xlu0 %1270
        %1272 = vrot.lane.b32.xlu0 %v1146, 24
        %v1273 = vpop.permute.xlu0 %1272
        %1274 = vrot.lane.b32.xlu0 %v1147, 24
        %v1275 = vpop.permute.xlu0 %1274
        %1276 = vrot.lane.b32.xlu0 %v1148, 24
        %v1277 = vpop.permute.xlu0 %1276
        %1294 = vrot.lane.b32.xlu0 %v1149, 32
        %v1295 = vpop.permute.xlu0 %1294
        %1296 = vrot.lane.b32.xlu0 %v1150, 32
        %v1297 = vpop.permute.xlu0 %1296
        %1298 = vrot.lane.b32.xlu0 %v1151, 32
        %v1299 = vpop.permute.xlu0 %1298
        %1300 = vrot.lane.b32.xlu0 %v1152, 32
        %v1301 = vpop.permute.xlu0 %1300
        %1302 = vrot.lane.b32.xlu0 %v1153, 32
        %v1303 = vpop.permute.xlu0 %1302
        %1304 = vrot.lane.b32.xlu0 %v1154, 32
        %v1305 = vpop.permute.xlu0 %1304
        %1306 = vrot.lane.b32.xlu0 %v1155, 32
        %v1307 = vpop.permute.xlu0 %1306
        %1308 = vrot.lane.b32.xlu0 %v1156, 32
        %v1309 = vpop.permute.xlu0 %1308
        %1326 = vrot.lane.b32.xlu0 %v1157, 40
        %v1327 = vpop.permute.xlu0 %1326
        %1328 = vrot.lane.b32.xlu0 %v1158, 40
        %v1329 = vpop.permute.xlu0 %1328
        %1330 = vrot.lane.b32.xlu0 %v1159, 40
        %v1331 = vpop.permute.xlu0 %1330
        %1332 = vrot.lane.b32.xlu0 %v1160, 40
        %v1333 = vpop.permute.xlu0 %1332
        %1334 = vrot.lane.b32.xlu0 %v1161, 40
        %v1335 = vpop.permute.xlu0 %1334
        %1336 = vrot.lane.b32.xlu0 %v1162, 40
        %v1337 = vpop.permute.xlu0 %1336
        %1338 = vrot.lane.b32.xlu0 %v1163, 40
        %v1339 = vpop.permute.xlu0 %1338
        %1340 = vrot.lane.b32.xlu0 %v1164, 40
        %v1341 = vpop.permute.xlu0 %1340
        %1358 = vrot.lane.b32.xlu0 %v1166, 48
        %v1359 = vpop.permute.xlu0 %1358
        %1360 = vrot.lane.b32.xlu0 %v1167, 48
        %v1361 = vpop.permute.xlu0 %1360
        %1362 = vrot.lane.b32.xlu0 %v1168, 48
        %v1363 = vpop.permute.xlu0 %1362
        %1364 = vrot.lane.b32.xlu0 %v1169, 48
        %v1365 = vpop.permute.xlu0 %1364
        %1366 = vrot.lane.b32.xlu0 %v1170, 48
        %v1367 = vpop.permute.xlu0 %1366
        %1368 = vrot.lane.b32.xlu0 %v1171, 48
        %v1369 = vpop.permute.xlu0 %1368
        %1370 = vrot.lane.b32.xlu0 %v1172, 48
        %v1371 = vpop.permute.xlu0 %1370
        %1372 = vrot.lane.b32.xlu0 %v1173, 48
        %v1373 = vpop.permute.xlu0 %1372
        %1390 = vrot.lane.b32.xlu0 %v1174, 56
        %v1391 = vpop.permute.xlu0 %1390
        %1392 = vrot.lane.b32.xlu0 %v1175, 56
        %v1393 = vpop.permute.xlu0 %1392
        %1394 = vrot.lane.b32.xlu0 %v1176, 56
        %v1395 = vpop.permute.xlu0 %1394
        %1396 = vrot.lane.b32.xlu0 %v1177, 56
        %v1397 = vpop.permute.xlu0 %1396
        %1398 = vrot.lane.b32.xlu0 %v1178, 56
        %v1399 = vpop.permute.xlu0 %1398
        %1400 = vrot.lane.b32.xlu0 %v1179, 56
        %v1401 = vpop.permute.xlu0 %1400
        %1402 = vrot.lane.b32.xlu0 %v1180, 56
        %v1403 = vpop.permute.xlu0 %1402
        %1404 = vrot.lane.b32.xlu0 %v1181, 56
        %v1405 = vpop.permute.xlu0 %1404
        %1422 = vrot.lane.b32.xlu0 %v1182, 64
        %v1423 = vpop.permute.xlu0 %1422
        %1424 = vrot.lane.b32.xlu0 %v1183, 64
        %v1425 = vpop.permute.xlu0 %1424
        %1426 = vrot.lane.b32.xlu0 %v1184, 64
        %v1427 = vpop.permute.xlu0 %1426
        %1428 = vrot.lane.b32.xlu0 %v1185, 64
        %v1429 = vpop.permute.xlu0 %1428
        %1430 = vrot.lane.b32.xlu0 %v1186, 64
        %v1431 = vpop.permute.xlu0 %1430
        %1432 = vrot.lane.b32.xlu0 %v1187, 64
        %v1433 = vpop.permute.xlu0 %1432
        %1434 = vrot.lane.b32.xlu0 %v1188, 64
        %v1435 = vpop.permute.xlu0 %1434
        %1436 = vrot.lane.b32.xlu0 %v1189, 64
        %v1437 = vpop.permute.xlu0 %1436
        %v1446 = vsel %vm809, %v1117, %v1199
        %v1447 = vsel %vm809, %v1118, %v1201
        %v1448 = vsel %vm809, %v1119, %v1203
        %v1449 = vsel %vm809, %v1120, %v1205
        %v1450 = vsel %vm809, %v1121, %v1207
        %v1451 = vsel %vm809, %v1122, %v1209
        %v1452 = vsel %vm809, %v1123, %v1211
        %v1453 = vsel %vm809, %v1124, %v1213
        %v1454 = vsel %vm827, %v1446, %v1231
        %v1455 = vsel %vm827, %v1447, %v1233
        %v1456 = vsel %vm827, %v1448, %v1235
        %v1457 = vsel %vm827, %v1449, %v1237
        %v1458 = vsel %vm827, %v1450, %v1239
        %v1459 = vsel %vm827, %v1451, %v1241
        %v1460 = vsel %vm827, %v1452, %v1243
        %v1461 = vsel %vm827, %v1453, %v1245
        %v1462 = vsel %vm845, %v1454, %v1263
        %v1463 = vsel %vm845, %v1455, %v1265
        %v1464 = vsel %vm845, %v1456, %v1267
        %v1465 = vsel %vm845, %v1457, %v1269
        %v1466 = vsel %vm845, %v1458, %v1271
        %v1467 = vsel %vm845, %v1459, %v1273
        %v1468 = vsel %vm845, %v1460, %v1275
        %v1469 = vsel %vm845, %v1461, %v1277
        %v1470 = vsel %vm863, %v1462, %v1295
        %v1471 = vsel %vm863, %v1463, %v1297
        %v1472 = vsel %vm863, %v1464, %v1299
        %v1473 = vsel %vm863, %v1465, %v1301
        %v1474 = vsel %vm863, %v1466, %v1303
        %v1475 = vsel %vm863, %v1467, %v1305
        %v1476 = vsel %vm863, %v1468, %v1307
        %v1477 = vsel %vm863, %v1469, %v1309
        %vm1478 = vcmask 326656
        %v1479 = vsel %vm1478, %v1470, %v1327
        %v1480 = vsel %vm1478, %v1471, %v1329
        %v1481 = vsel %vm1478, %v1472, %v1331
        %v1482 = vsel %vm1478, %v1473, %v1333
        %v1483 = vsel %vm1478, %v1474, %v1335
        %v1484 = vsel %vm1478, %v1475, %v1337
        %v1485 = vsel %vm1478, %v1476, %v1339
        %v1486 = vsel %vm1478, %v1477, %v1341
        %vm1487 = vcmask 392192
        %v1488 = vsel %vm1487, %v1479, %v1359
        %v1489 = vsel %vm1487, %v1480, %v1361
        %v1490 = vsel %vm1487, %v1481, %v1363
        %v1491 = vsel %vm1487, %v1482, %v1365
        %v1492 = vsel %vm1487, %v1483, %v1367
        %v1493 = vsel %vm1487, %v1484, %v1369
        %v1494 = vsel %vm1487, %v1485, %v1371
        %v1495 = vsel %vm1487, %v1486, %v1373
        %vm1496 = vcmask 457728
        %v1497 = vsel %vm1496, %v1488, %v1391
        %v1498 = vsel %vm1496, %v1489, %v1393
        %v1499 = vsel %vm1496, %v1490, %v1395
        %v1500 = vsel %vm1496, %v1491, %v1397
        %v1501 = vsel %vm1496, %v1492, %v1399
        %v1502 = vsel %vm1496, %v1493, %v1401
        %v1503 = vsel %vm1496, %v1494, %v1403
        %v1504 = vsel %vm1496, %v1495, %v1405
        %vm1505 = vcmask 523264
        %v1506 = vsel %vm1505, %v1497, %v1423
        %v1507 = vsel %vm1505, %v1498, %v1425
        %v1508 = vsel %vm1505, %v1499, %v1427
        %v1509 = vsel %vm1505, %v1500, %v1429
        %v1510 = vsel %vm1505, %v1501, %v1431
        %v1511 = vsel %vm1505, %v1502, %v1433
        %v1512 = vsel %vm1505, %v1503, %v1435
        %v1513 = vsel %vm1505, %v1504, %v1437
        %v1514 = vld [vmem:[%s3] sm:$0xff]
        %v1515 = vld [vmem:[%s3 + $0x8] sm:$0xff]
        %v1516 = vld [vmem:[%s3 + $0x10] sm:$0xff]
        %v1517 = vld [vmem:[%s3 + $0x18] sm:$0xff]
        %v1518 = vld [vmem:[%s3 + $0x20] sm:$0xff]
        %v1519 = vld [vmem:[%s3 + $0x28] sm:$0xff]
        %v1520 = vld [vmem:[%s3 + $0x30] sm:$0xff]
        %v1521 = vld [vmem:[%s3 + $0x38] sm:$0xff]
        %v1522 = vld [vmem:[%s3 + $0x40] sm:$0xff]
        %v1523 = vld [vmem:[%s4] sm:$0x1]
        %v1525 = vlaneseq
        %v1526 = vshrl.u32 %v1525, 7
        %v1527 = vsub.s32 0, %v1526
        %v1528 = vrot.slane %v1523, %v1527
        %vm1530 = vcmask 588800
        %v1532 = vsel %vm1530, %v1506, 0
        %v1535 = vsel %vm1530, %v1507, 0
        %v1538 = vsel %vm1530, %v1508, 0
        %v1541 = vsel %vm1530, %v1509, 0
        %v1544 = vsel %vm1530, %v1510, 0
        %v1547 = vsel %vm1530, %v1511, 0
        %v1550 = vsel %vm1530, %v1512, 0
        %v1553 = vsel %vm1530, %v1513, 0
        %1555 = vmatprep.subr.mxu0 0.0
        %1556 = vmatpush1.msra.mxu0 %v1514
        %1557 = vmatprep.subr.mxu0 0.0
        %1558 = vmatpush1.msra.mxu0 %v1515
        %1559 = vmatprep.subr.mxu0 0.0
        %1560 = vmatpush1.msra.mxu0 %v1516
        %1561 = vmatprep.subr.mxu0 0.0
        %1562 = vmatpush1.msra.mxu0 %v1517
        %1563 = vmatprep.subr.mxu0 0.0
        %1564 = vmatpush1.msra.mxu0 %v1518
        %1565 = vmatprep.subr.mxu0 0.0
        %1566 = vmatpush1.msra.mxu0 %v1519
        %1567 = vmatprep.subr.mxu0 0.0
        %1568 = vmatpush1.msra.mxu0 %v1520
        %1569 = vmatprep.subr.mxu0 0.0
        %1570 = vmatpush1.msra.mxu0 %v1521
        %1571 = vmatprep.subr.mxu0 0.0
        %1572 = vmatpush1.msra.mxu0 %v1522
        %1573 = vmatprep.subr.mxu0 0.0
        %1574 = vmatpush1.msra.mxu0 0.0
        %1575 = vmatprep.subr.mxu0 0.0
        %1576 = vmatpush1.msra.mxu0 0.0
        %1577 = vmatprep.subr.mxu0 0.0
        %1578 = vmatpush1.msra.mxu0 0.0
        %1579 = vmatprep.subr.mxu0 0.0
        %1580 = vmatpush1.msra.mxu0 0.0
        %1581 = vmatprep.subr.mxu0 0.0
        %1582 = vmatpush1.msra.mxu0 0.0
        %1583 = vmatprep.subr.mxu0 0.0
        %1584 = vmatpush1.msra.mxu0 0.0
        %1585 = vmatprep.subr.mxu0 0.0
        %1586 = vmatpush1.msra.mxu0 0.0
        %1587 = vmatprep.subr.mxu0 0.0
        %1588 = vmatpush1.msra.mxu0 0.0
        %1589 = vmatprep.subr.mxu0 0.0
        %1590 = vmatpush1.msra.mxu0 0.0
        %1591 = vmatprep.subr.mxu0 0.0
        %1592 = vmatpush1.msra.mxu0 0.0
        %1593 = vmatprep.subr.mxu0 0.0
        %1594 = vmatpush1.msra.mxu0 0.0
        %1595 = vmatprep.subr.mxu0 0.0
        %1596 = vmatpush1.msra.mxu0 0.0
        %1597 = vmatprep.subr.mxu0 0.0
        %1598 = vmatpush1.msra.mxu0 0.0
        %1599 = vmatprep.subr.mxu0 0.0
        %1600 = vmatpush1.msra.mxu0 0.0
        %1601 = vmatprep.subr.mxu0 0.0
        %1602 = vmatpush1.msra.mxu0 0.0
        %1603 = vmatprep.subr.mxu0 0.0
        %1604 = vmatpush1.msra.mxu0 0.0
        %1605 = vmatprep.subr.mxu0 0.0
        %1606 = vmatpush1.msra.mxu0 0.0
        %1607 = vmatprep.subr.mxu0 0.0
        %1608 = vmatpush1.msra.mxu0 0.0
        %1609 = vmatprep.subr.mxu0 0.0
        %1610 = vmatpush1.msra.mxu0 0.0
        %1611 = vmatprep.subr.mxu0 0.0
        %1612 = vmatpush1.msra.mxu0 0.0
        %1613 = vmatprep.subr.mxu0 0.0
        %1614 = vmatpush1.msra.mxu0 0.0
        %1615 = vmatprep.subr.mxu0 0.0
        %1616 = vmatpush1.msra.mxu0 0.0
        %1617 = vmatprep.subr.mxu0 0.0
        %1618 = vmatpush1.msra.mxu0 0.0
        %1619 = vmatprep.mubr.f32.mxu0 0.0
        %1620 = vmatmul.mubr.f32.gmra.mrb[0].mxu0 %v1532
        %v1621 = vpop.f32.mrb[0].mxu0
        %v1622 = vadd.f32 %v1528, %v1621
        %v1623 = vpop.f32.mrb[0].mxu0
        %1624 = vmatprep.mubr.f32.mxu0 0.0
        %1625 = vmatmul.mubr.f32.gmra.mrb[0].mxu0 %v1535
        %v1626 = vpop.f32.mrb[0].mxu0
        %v1627 = vadd.f32 %v1528, %v1626
        %v1628 = vpop.f32.mrb[0].mxu0
        %1629 = vmatprep.mubr.f32.mxu0 0.0
        %1630 = vmatmul.mubr.f32.gmra.mrb[0].mxu0 %v1538
        %v1631 = vpop.f32.mrb[0].mxu0
        %v1632 = vadd.f32 %v1528, %v1631
        %v1633 = vpop.f32.mrb[0].mxu0
        %1634 = vmatprep.mubr.f32.mxu0 0.0
        %1635 = vmatmul.mubr.f32.gmra.mrb[0].mxu0 %v1541
        %v1636 = vpop.f32.mrb[0].mxu0
        %v1637 = vadd.f32 %v1528, %v1636
        %v1638 = vpop.f32.mrb[0].mxu0
        %1639 = vmatprep.mubr.f32.mxu0 0.0
        %1640 = vmatmul.mubr.f32.gmra.mrb[0].mxu0 %v1544
        %v1641 = vpop.f32.mrb[0].mxu0
        %v1642 = vadd.f32 %v1528, %v1641
        %v1643 = vpop.f32.mrb[0].mxu0
        %1644 = vmatprep.mubr.f32.mxu0 0.0
        %1645 = vmatmul.mubr.f32.gmra.mrb[0].mxu0 %v1547
        %v1646 = vpop.f32.mrb[0].mxu0
        %v1647 = vadd.f32 %v1528, %v1646
        %v1648 = vpop.f32.mrb[0].mxu0
        %1649 = vmatprep.mubr.f32.mxu0 0.0
        %1650 = vmatmul.mubr.f32.gmra.mrb[0].mxu0 %v1550
        %v1651 = vpop.f32.mrb[0].mxu0
        %v1652 = vadd.f32 %v1528, %v1651
        %v1653 = vpop.f32.mrb[0].mxu0
        %1654 = vmatprep.mubr.f32.mxu0 0.0
        %1655 = vmatmul.mubr.f32.gmra.mrb[0].mxu0 %v1553
        %v1656 = vpop.f32.mrb[0].mxu0
        %v1657 = vadd.f32 %v1528, %v1656
        %v1658 = vpop.f32.mrb[0].mxu0
        %1659 = vdwg.mxu0
        %v1660 = vadd.f32 %v1622, %v1627
        %v1661 = vadd.f32 %v1660, %v1632
        %v1662 = vadd.f32 %v1661, %v1637
        %v1663 = vadd.f32 %v1662, %v1642
        %v1664 = vadd.f32 %v1663, %v1647
        %v1665 = vadd.f32 %v1664, %v1652
        %v1666 = vadd.f32 %v1665, %v1657
        %v1667 = vrot.slane %v1666, 4
        %v1668 = vadd.f32 %v1666, %v1667
        %v1669 = vrot.slane %v1668, 2
        %v1670 = vadd.f32 %v1668, %v1669
        %v1671 = vrot.slane %v1670, 1
        %v1672 = vadd.f32 %v1670, %v1671
        %v1673 = vmul.f32 %v1672, %v1031
        %v1674 = vsub.f32 %v1622, %v1673
        %v1675 = vsub.f32 %v1627, %v1673
        %v1676 = vsub.f32 %v1632, %v1673
        %v1677 = vsub.f32 %v1637, %v1673
        %v1678 = vsub.f32 %v1642, %v1673
        %v1679 = vsub.f32 %v1647, %v1673
        %v1680 = vsub.f32 %v1652, %v1673
        %v1681 = vsub.f32 %v1657, %v1673
        %v1682 = vmul.f32 %v1674, %v1674
        %v1683 = vmul.f32 %v1675, %v1675
        %v1684 = vmul.f32 %v1676, %v1676
        %v1685 = vmul.f32 %v1677, %v1677
        %v1686 = vmul.f32 %v1678, %v1678
        %v1687 = vmul.f32 %v1679, %v1679
        %v1688 = vmul.f32 %v1680, %v1680
        %v1689 = vmul.f32 %v1681, %v1681
        %v1690 = vadd.f32 %v1682, %v1683
        %v1691 = vadd.f32 %v1690, %v1684
        %v1692 = vadd.f32 %v1691, %v1685
        %v1693 = vadd.f32 %v1692, %v1686
        %v1694 = vadd.f32 %v1693, %v1687
        %v1695 = vadd.f32 %v1694, %v1688
        %v1696 = vadd.f32 %v1695, %v1689
        %v1697 = vrot.slane %v1696, 4
        %v1698 = vadd.f32 %v1696, %v1697
        %v1699 = vrot.slane %v1698, 2
        %v1700 = vadd.f32 %v1698, %v1699
        %v1701 = vrot.slane %v1700, 1
        %v1702 = vadd.f32 %v1700, %v1701
        %v1703 = vmul.f32 %v1702, %v1031
        %v1704 = vadd.f32 %v1703, 1e-05
        %v1705 = vrsqrt.pop %v1704
        %v1706 = vmul.f32 %v1674, %v1705
        %v1707 = vmul.f32 %v1675, %v1705
        %v1708 = vmul.f32 %v1676, %v1705
        %v1709 = vmul.f32 %v1677, %v1705
        %v1710 = vmul.f32 %v1678, %v1705
        %v1711 = vmul.f32 %v1679, %v1705
        %v1712 = vmul.f32 %v1680, %v1705
        %v1713 = vmul.f32 %v1681, %v1705
        %1722 = vrot.lane.b32.xlu0 %v1706, 4
        %v1723 = vpop.permute.xlu0 %1722
        %1724 = vrot.lane.b32.xlu0 %v1707, 4
        %v1725 = vpop.permute.xlu0 %1724
        %1726 = vrot.lane.b32.xlu0 %v1708, 4
        %v1727 = vpop.permute.xlu0 %1726
        %1728 = vrot.lane.b32.xlu0 %v1709, 4
        %v1729 = vpop.permute.xlu0 %1728
        %1730 = vrot.lane.b32.xlu0 %v1710, 4
        %v1731 = vpop.permute.xlu0 %1730
        %1732 = vrot.lane.b32.xlu0 %v1711, 4
        %v1733 = vpop.permute.xlu0 %1732
        %1734 = vrot.lane.b32.xlu0 %v1712, 4
        %v1735 = vpop.permute.xlu0 %1734
        %1736 = vrot.lane.b32.xlu0 %v1713, 4
        %v1737 = vpop.permute.xlu0 %1736
        %v1746 = vsel %vm435, %v427, %v1723
        %v1747 = vsel %vm435, %v428, %v1725
        %v1748 = vsel %vm435, %v429, %v1727
        %v1749 = vsel %vm435, %v430, %v1729
        %v1750 = vsel %vm435, %v431, %v1731
        %v1751 = vsel %vm435, %v432, %v1733
        %v1752 = vsel %vm435, %v433, %v1735
        %v1753 = vsel %vm435, %v434, %v1737
        %v1754 = vld [vmem:[%s5] sm:$0xff]
        %v1755 = vld [vmem:[%s5 + $0x8] sm:$0xf]
        %v1756 = vld [vmem:[%s6] sm:$0x1]
        %v1758 = vlaneseq
        %v1759 = vshrl.u32 %v1758, 7
        %v1760 = vsub.s32 0, %v1759
        %v1761 = vrot.slane %v1756, %v1760
        %v1764 = vsel %vm818, %v1746, 0
        %v1767 = vsel %vm818, %v1747, 0
        %v1770 = vsel %vm818, %v1748, 0
        %v1773 = vsel %vm818, %v1749, 0
        %v1776 = vsel %vm818, %v1750, 0
        %v1779 = vsel %vm818, %v1751, 0
        %v1782 = vsel %vm818, %v1752, 0
        %v1785 = vsel %vm818, %v1753, 0
        %v1788 = vsel %vm909, %v1755, 0
        %1790 = vmatprep.subr.mxu0 0.0
        %1791 = vmatpush1.msra.mxu0 %v1754
        %1792 = vmatprep.subr.mxu0 0.0
        %1793 = vmatpush1.msra.mxu0 %v1788
        %1794 = vmatprep.subr.mxu0 0.0
        %1795 = vmatpush1.msra.mxu0 0.0
        %1796 = vmatprep.subr.mxu0 0.0
        %1797 = vmatpush1.msra.mxu0 0.0
        %1798 = vmatprep.subr.mxu0 0.0
        %1799 = vmatpush1.msra.mxu0 0.0
        %1800 = vmatprep.subr.mxu0 0.0
        %1801 = vmatpush1.msra.mxu0 0.0
        %1802 = vmatprep.subr.mxu0 0.0
        %1803 = vmatpush1.msra.mxu0 0.0
        %1804 = vmatprep.subr.mxu0 0.0
        %1805 = vmatpush1.msra.mxu0 0.0
        %1806 = vmatprep.subr.mxu0 0.0
        %1807 = vmatpush1.msra.mxu0 0.0
        %1808 = vmatprep.subr.mxu0 0.0
        %1809 = vmatpush1.msra.mxu0 0.0
        %1810 = vmatprep.subr.mxu0 0.0
        %1811 = vmatpush1.msra.mxu0 0.0
        %1812 = vmatprep.subr.mxu0 0.0
        %1813 = vmatpush1.msra.mxu0 0.0
        %1814 = vmatprep.subr.mxu0 0.0
        %1815 = vmatpush1.msra.mxu0 0.0
        %1816 = vmatprep.subr.mxu0 0.0
        %1817 = vmatpush1.msra.mxu0 0.0
        %1818 = vmatprep.subr.mxu0 0.0
        %1819 = vmatpush1.msra.mxu0 0.0
        %1820 = vmatprep.subr.mxu0 0.0
        %1821 = vmatpush1.msra.mxu0 0.0
        %1822 = vmatprep.subr.mxu0 0.0
        %1823 = vmatpush1.msra.mxu0 0.0
        %1824 = vmatprep.subr.mxu0 0.0
        %1825 = vmatpush1.msra.mxu0 0.0
        %1826 = vmatprep.subr.mxu0 0.0
        %1827 = vmatpush1.msra.mxu0 0.0
        %1828 = vmatprep.subr.mxu0 0.0
        %1829 = vmatpush1.msra.mxu0 0.0
        %1830 = vmatprep.subr.mxu0 0.0
        %1831 = vmatpush1.msra.mxu0 0.0
        %1832 = vmatprep.subr.mxu0 0.0
        %1833 = vmatpush1.msra.mxu0 0.0
        %1834 = vmatprep.subr.mxu0 0.0
        %1835 = vmatpush1.msra.mxu0 0.0
        %1836 = vmatprep.subr.mxu0 0.0
        %1837 = vmatpush1.msra.mxu0 0.0
        %1838 = vmatprep.subr.mxu0 0.0
        %1839 = vmatpush1.msra.mxu0 0.0
        %1840 = vmatprep.subr.mxu0 0.0
        %1841 = vmatpush1.msra.mxu0 0.0
        %1842 = vmatprep.subr.mxu0 0.0
        %1843 = vmatpush1.msra.mxu0 0.0
        %1844 = vmatprep.subr.mxu0 0.0
        %1845 = vmatpush1.msra.mxu0 0.0
        %1846 = vmatprep.subr.mxu0 0.0
        %1847 = vmatpush1.msra.mxu0 0.0
        %1848 = vmatprep.subr.mxu0 0.0
        %1849 = vmatpush1.msra.mxu0 0.0
        %1850 = vmatprep.subr.mxu0 0.0
        %1851 = vmatpush1.msra.mxu0 0.0
        %1852 = vmatprep.subr.mxu0 0.0
        %1853 = vmatpush1.msra.mxu0 0.0
        %1854 = vmatprep.mubr.f32.mxu0 0.0
        %1855 = vmatmul.mubr.f32.gmra.mrb[0].mxu0 %v1764
        %v1856 = vpop.f32.mrb[0].mxu0
        %v1857 = vadd.f32 %v1761, %v1856
        %v1858 = vpop.f32.mrb[0].mxu0
        %1859 = vmatprep.mubr.f32.mxu0 0.0
        %1860 = vmatmul.mubr.f32.gmra.mrb[0].mxu0 %v1767
        %v1861 = vpop.f32.mrb[0].mxu0
        %v1862 = vadd.f32 %v1761, %v1861
        %v1863 = vpop.f32.mrb[0].mxu0
        %1864 = vmatprep.mubr.f32.mxu0 0.0
        %1865 = vmatmul.mubr.f32.gmra.mrb[0].mxu0 %v1770
        %v1866 = vpop.f32.mrb[0].mxu0
        %v1867 = vadd.f32 %v1761, %v1866
        %v1868 = vpop.f32.mrb[0].mxu0
        %1869 = vmatprep.mubr.f32.mxu0 0.0
        %1870 = vmatmul.mubr.f32.gmra.mrb[0].mxu0 %v1773
        %v1871 = vpop.f32.mrb[0].mxu0
        %v1872 = vadd.f32 %v1761, %v1871
        %v1873 = vpop.f32.mrb[0].mxu0
        %1874 = vmatprep.mubr.f32.mxu0 0.0
        %1875 = vmatmul.mubr.f32.gmra.mrb[0].mxu0 %v1776
        %v1876 = vpop.f32.mrb[0].mxu0
        %v1877 = vadd.f32 %v1761, %v1876
        %v1878 = vpop.f32.mrb[0].mxu0
        %1879 = vmatprep.mubr.f32.mxu0 0.0
        %1880 = vmatmul.mubr.f32.gmra.mrb[0].mxu0 %v1779
        %v1881 = vpop.f32.mrb[0].mxu0
        %v1882 = vadd.f32 %v1761, %v1881
        %v1883 = vpop.f32.mrb[0].mxu0
        %1884 = vmatprep.mubr.f32.mxu0 0.0
        %1885 = vmatmul.mubr.f32.gmra.mrb[0].mxu0 %v1782
        %v1886 = vpop.f32.mrb[0].mxu0
        %v1887 = vadd.f32 %v1761, %v1886
        %v1888 = vpop.f32.mrb[0].mxu0
        %1889 = vmatprep.mubr.f32.mxu0 0.0
        %1890 = vmatmul.mubr.f32.gmra.mrb[0].mxu0 %v1785
        %v1891 = vpop.f32.mrb[0].mxu0
        %v1892 = vadd.f32 %v1761, %v1891
        %v1893 = vpop.f32.mrb[0].mxu0
        %1894 = vdwg.mxu0
        %v1895 = vadd.f32 %v1857, %v1862
        %v1896 = vadd.f32 %v1895, %v1867
        %v1897 = vadd.f32 %v1896, %v1872
        %v1898 = vadd.f32 %v1897, %v1877
        %v1899 = vadd.f32 %v1898, %v1882
        %v1900 = vadd.f32 %v1899, %v1887
        %v1901 = vadd.f32 %v1900, %v1892
        %v1902 = vrot.slane %v1901, 4
        %v1903 = vadd.f32 %v1901, %v1902
        %v1904 = vrot.slane %v1903, 2
        %v1905 = vadd.f32 %v1903, %v1904
        %v1906 = vrot.slane %v1905, 1
        %v1907 = vadd.f32 %v1905, %v1906
        %v1908 = vmul.f32 %v1907, %v1031
        %v1909 = vsub.f32 %v1857, %v1908
        %v1910 = vsub.f32 %v1862, %v1908
        %v1911 = vsub.f32 %v1867, %v1908
        %v1912 = vsub.f32 %v1872, %v1908
        %v1913 = vsub.f32 %v1877, %v1908
        %v1914 = vsub.f32 %v1882, %v1908
        %v1915 = vsub.f32 %v1887, %v1908
        %v1916 = vsub.f32 %v1892, %v1908
        %v1917 = vmul.f32 %v1909, %v1909
        %v1918 = vmul.f32 %v1910, %v1910
        %v1919 = vmul.f32 %v1911, %v1911
        %v1920 = vmul.f32 %v1912, %v1912
        %v1921 = vmul.f32 %v1913, %v1913
        %v1922 = vmul.f32 %v1914, %v1914
        %v1923 = vmul.f32 %v1915, %v1915
        %v1924 = vmul.f32 %v1916, %v1916
        %v1925 = vadd.f32 %v1917, %v1918
        %v1926 = vadd.f32 %v1925, %v1919
        %v1927 = vadd.f32 %v1926, %v1920
        %v1928 = vadd.f32 %v1927, %v1921
        %v1929 = vadd.f32 %v1928, %v1922
        %v1930 = vadd.f32 %v1929, %v1923
        %v1931 = vadd.f32 %v1930, %v1924
        %v1932 = vrot.slane %v1931, 4
        %v1933 = vadd.f32 %v1931, %v1932
        %v1934 = vrot.slane %v1933, 2
        %v1935 = vadd.f32 %v1933, %v1934
        %v1936 = vrot.slane %v1935, 1
        %v1937 = vadd.f32 %v1935, %v1936
        %v1938 = vmul.f32 %v1937, %v1031
        %v1939 = vadd.f32 %v1938, 1e-05
        %v1940 = vrsqrt.pop %v1939
        %v1941 = vmul.f32 %v1909, %v1940
        %v1942 = vmul.f32 %v1910, %v1940
        %v1943 = vmul.f32 %v1911, %v1940
        %v1944 = vmul.f32 %v1912, %v1940
        %v1945 = vmul.f32 %v1913, %v1940
        %v1946 = vmul.f32 %v1914, %v1940
        %v1947 = vmul.f32 %v1915, %v1940
        %v1948 = vmul.f32 %v1916, %v1940
        %v1949 = vmax.f32 %v1941, 0.0
        %v1950 = vmax.f32 %v1942, 0.0
        %v1951 = vmax.f32 %v1943, 0.0
        %v1952 = vmax.f32 %v1944, 0.0
        %v1953 = vmax.f32 %v1945, 0.0
        %v1954 = vmax.f32 %v1946, 0.0
        %v1955 = vmax.f32 %v1947, 0.0
        %v1956 = vmax.f32 %v1948, 0.0
        %v1957 = vld [vmem:[%s7] sm:$0xff]
        %v1958 = vld [vmem:[%s7 + $0x8] sm:$0xff]
        %v1959 = vld [vmem:[%s7 + $0x10] sm:$0xff]
        %v1960 = vld [vmem:[%s7 + $0x18] sm:$0xff]
        %v1961 = vld [vmem:[%s7 + $0x20] sm:$0xff]
        %v1962 = vld [vmem:[%s7 + $0x28] sm:$0xff]
        %v1963 = vld [vmem:[%s7 + $0x30] sm:$0xff]
        %v1964 = vld [vmem:[%s7 + $0x38] sm:$0xff]
        %v1965 = vld [vmem:[%s7 + $0x40] sm:$0xff]
        %v1966 = vld [vmem:[%s7 + $0x48] sm:$0xff]
        %v1967 = vld [vmem:[%s7 + $0x50] sm:$0xff]
        %v1968 = vld [vmem:[%s7 + $0x58] sm:$0xff]
        %v1969 = vld [vmem:[%s7 + $0x60] sm:$0xff]
        %v1970 = vld [vmem:[%s7 + $0x68] sm:$0xff]
        %v1971 = vld [vmem:[%s7 + $0x70] sm:$0xff]
        %v1972 = vld [vmem:[%s7 + $0x78] sm:$0xff]
        %v1973 = vld [vmem:[%s8] sm:$0x1]
        %v1975 = vlaneseq
        %v1976 = vshrl.u32 %v1975, 7
        %v1977 = vsub.s32 0, %v1976
        %v1978 = vrot.slane %v1973, %v1977
        %1980 = vmatprep.subr.mxu0 0.0
        %1981 = vmatpush1.msra.mxu0 %v1957
        %1982 = vmatprep.subr.mxu0 0.0
        %1983 = vmatpush1.msra.mxu0 %v1958
        %1984 = vmatprep.subr.mxu0 0.0
        %1985 = vmatpush1.msra.mxu0 %v1959
        %1986 = vmatprep.subr.mxu0 0.0
        %1987 = vmatpush1.msra.mxu0 %v1960
        %1988 = vmatprep.subr.mxu0 0.0
        %1989 = vmatpush1.msra.mxu0 %v1961
        %1990 = vmatprep.subr.mxu0 0.0
        %1991 = vmatpush1.msra.mxu0 %v1962
        %1992 = vmatprep.subr.mxu0 0.0
        %1993 = vmatpush1.msra.mxu0 %v1963
        %1994 = vmatprep.subr.mxu0 0.0
        %1995 = vmatpush1.msra.mxu0 %v1964
        %1996 = vmatprep.subr.mxu0 0.0
        %1997 = vmatpush1.msra.mxu0 %v1965
        %1998 = vmatprep.subr.mxu0 0.0
        %1999 = vmatpush1.msra.mxu0 %v1966
        %2000 = vmatprep.subr.mxu0 0.0
        %2001 = vmatpush1.msra.mxu0 %v1967
        %2002 = vmatprep.subr.mxu0 0.0
        %2003 = vmatpush1.msra.mxu0 %v1968
        %2004 = vmatprep.subr.mxu0 0.0
        %2005 = vmatpush1.msra.mxu0 %v1969
        %2006 = vmatprep.subr.mxu0 0.0
        %2007 = vmatpush1.msra.mxu0 %v1970
        %2008 = vmatprep.subr.mxu0 0.0
        %2009 = vmatpush1.msra.mxu0 %v1971
        %2010 = vmatprep.subr.mxu0 0.0
        %2011 = vmatpush1.msra.mxu0 %v1972
        %2012 = vmatprep.subr.mxu0 0.0
        %2013 = vmatpush1.msra.mxu0 0.0
        %2014 = vmatprep.subr.mxu0 0.0
        %2015 = vmatpush1.msra.mxu0 0.0
        %2016 = vmatprep.subr.mxu0 0.0
        %2017 = vmatpush1.msra.mxu0 0.0
        %2018 = vmatprep.subr.mxu0 0.0
        %2019 = vmatpush1.msra.mxu0 0.0
        %2020 = vmatprep.subr.mxu0 0.0
        %2021 = vmatpush1.msra.mxu0 0.0
        %2022 = vmatprep.subr.mxu0 0.0
        %2023 = vmatpush1.msra.mxu0 0.0
        %2024 = vmatprep.subr.mxu0 0.0
        %2025 = vmatpush1.msra.mxu0 0.0
        %2026 = vmatprep.subr.mxu0 0.0
        %2027 = vmatpush1.msra.mxu0 0.0
        %2028 = vmatprep.subr.mxu0 0.0
        %2029 = vmatpush1.msra.mxu0 0.0
        %2030 = vmatprep.subr.mxu0 0.0
        %2031 = vmatpush1.msra.mxu0 0.0
        %2032 = vmatprep.subr.mxu0 0.0
        %2033 = vmatpush1.msra.mxu0 0.0
        %2034 = vmatprep.subr.mxu0 0.0
        %2035 = vmatpush1.msra.mxu0 0.0
        %2036 = vmatprep.subr.mxu0 0.0
        %2037 = vmatpush1.msra.mxu0 0.0
        %2038 = vmatprep.subr.mxu0 0.0
        %2039 = vmatpush1.msra.mxu0 0.0
        %2040 = vmatprep.subr.mxu0 0.0
        %2041 = vmatpush1.msra.mxu0 0.0
        %2042 = vmatprep.subr.mxu0 0.0
        %2043 = vmatpush1.msra.mxu0 0.0
        %2044 = vmatprep.mubr.f32.mxu0 0.0
        %2045 = vmatmul.mubr.f32.gmra.mrb[0].mxu0 %v1949
        %v2046 = vpop.f32.mrb[0].mxu0
        %v2047 = vadd.f32 %v1978, %v2046
        %v2048 = vpop.f32.mrb[0].mxu0
        %2049 = vmatprep.mubr.f32.mxu0 0.0
        %2050 = vmatmul.mubr.f32.gmra.mrb[0].mxu0 %v1950
        %v2051 = vpop.f32.mrb[0].mxu0
        %v2052 = vadd.f32 %v1978, %v2051
        %v2053 = vpop.f32.mrb[0].mxu0
        %2054 = vmatprep.mubr.f32.mxu0 0.0
        %2055 = vmatmul.mubr.f32.gmra.mrb[0].mxu0 %v1951
        %v2056 = vpop.f32.mrb[0].mxu0
        %v2057 = vadd.f32 %v1978, %v2056
        %v2058 = vpop.f32.mrb[0].mxu0
        %2059 = vmatprep.mubr.f32.mxu0 0.0
        %2060 = vmatmul.mubr.f32.gmra.mrb[0].mxu0 %v1952
        %v2061 = vpop.f32.mrb[0].mxu0
        %v2062 = vadd.f32 %v1978, %v2061
        %v2063 = vpop.f32.mrb[0].mxu0
        %2064 = vmatprep.mubr.f32.mxu0 0.0
        %2065 = vmatmul.mubr.f32.gmra.mrb[0].mxu0 %v1953
        %v2066 = vpop.f32.mrb[0].mxu0
        %v2067 = vadd.f32 %v1978, %v2066
        %v2068 = vpop.f32.mrb[0].mxu0
        %2069 = vmatprep.mubr.f32.mxu0 0.0
        %2070 = vmatmul.mubr.f32.gmra.mrb[0].mxu0 %v1954
        %v2071 = vpop.f32.mrb[0].mxu0
        %v2072 = vadd.f32 %v1978, %v2071
        %v2073 = vpop.f32.mrb[0].mxu0
        %2074 = vmatprep.mubr.f32.mxu0 0.0
        %2075 = vmatmul.mubr.f32.gmra.mrb[0].mxu0 %v1955
        %v2076 = vpop.f32.mrb[0].mxu0
        %v2077 = vadd.f32 %v1978, %v2076
        %v2078 = vpop.f32.mrb[0].mxu0
        %2079 = vmatprep.mubr.f32.mxu0 0.0
        %2080 = vmatmul.mubr.f32.gmra.mrb[0].mxu0 %v1956
        %v2081 = vpop.f32.mrb[0].mxu0
        %v2082 = vadd.f32 %v1978, %v2081
        %v2083 = vpop.f32.mrb[0].mxu0
        %2084 = vdwg.mxu0
        %v2085 = vadd.f32 %v2047, %v2052
        %v2086 = vadd.f32 %v2085, %v2057
        %v2087 = vadd.f32 %v2086, %v2062
        %v2088 = vadd.f32 %v2087, %v2067
        %v2089 = vadd.f32 %v2088, %v2072
        %v2090 = vadd.f32 %v2089, %v2077
        %v2091 = vadd.f32 %v2090, %v2082
        %v2092 = vrot.slane %v2091, 4
        %v2093 = vadd.f32 %v2091, %v2092
        %v2094 = vrot.slane %v2093, 2
        %v2095 = vadd.f32 %v2093, %v2094
        %v2096 = vrot.slane %v2095, 1
        %v2097 = vadd.f32 %v2095, %v2096
        %v2098 = vmul.f32 %v2097, %v1031
        %v2099 = vsub.f32 %v2047, %v2098
        %v2100 = vsub.f32 %v2052, %v2098
        %v2101 = vsub.f32 %v2057, %v2098
        %v2102 = vsub.f32 %v2062, %v2098
        %v2103 = vsub.f32 %v2067, %v2098
        %v2104 = vsub.f32 %v2072, %v2098
        %v2105 = vsub.f32 %v2077, %v2098
        %v2106 = vsub.f32 %v2082, %v2098
        %v2107 = vmul.f32 %v2099, %v2099
        %v2108 = vmul.f32 %v2100, %v2100
        %v2109 = vmul.f32 %v2101, %v2101
        %v2110 = vmul.f32 %v2102, %v2102
        %v2111 = vmul.f32 %v2103, %v2103
        %v2112 = vmul.f32 %v2104, %v2104
        %v2113 = vmul.f32 %v2105, %v2105
        %v2114 = vmul.f32 %v2106, %v2106
        %v2115 = vadd.f32 %v2107, %v2108
        %v2116 = vadd.f32 %v2115, %v2109
        %v2117 = vadd.f32 %v2116, %v2110
        %v2118 = vadd.f32 %v2117, %v2111
        %v2119 = vadd.f32 %v2118, %v2112
        %v2120 = vadd.f32 %v2119, %v2113
        %v2121 = vadd.f32 %v2120, %v2114
        %v2122 = vrot.slane %v2121, 4
        %v2123 = vadd.f32 %v2121, %v2122
        %v2124 = vrot.slane %v2123, 2
        %v2125 = vadd.f32 %v2123, %v2124
        %v2126 = vrot.slane %v2125, 1
        %v2127 = vadd.f32 %v2125, %v2126
        %v2128 = vmul.f32 %v2127, %v1031
        %v2129 = vadd.f32 %v2128, 1e-05
        %v2130 = vrsqrt.pop %v2129
        %v2131 = vmul.f32 %v2099, %v2130
        %v2132 = vmul.f32 %v2100, %v2130
        %v2133 = vmul.f32 %v2101, %v2130
        %v2134 = vmul.f32 %v2102, %v2130
        %v2135 = vmul.f32 %v2103, %v2130
        %v2136 = vmul.f32 %v2104, %v2130
        %v2137 = vmul.f32 %v2105, %v2130
        %v2138 = vmul.f32 %v2106, %v2130
        %v2139 = vtanh.pop %v2131
        %v2140 = vtanh.pop %v2132
        %v2141 = vtanh.pop %v2133
        %v2142 = vtanh.pop %v2134
        %v2143 = vtanh.pop %v2135
        %v2144 = vtanh.pop %v2136
        %v2145 = vtanh.pop %v2137
        %v2146 = vtanh.pop %v2138
        %v2147 = vmul.f32 %v2139, 2.0
        %v2148 = vmul.f32 %v2140, 2.0
        %v2149 = vmul.f32 %v2141, 2.0
        %v2150 = vmul.f32 %v2142, 2.0
        %v2151 = vmul.f32 %v2143, 2.0
        %v2152 = vmul.f32 %v2144, 2.0
        %v2153 = vmul.f32 %v2145, 2.0
        %v2154 = vmul.f32 %v2146, 2.0
        %v2155 = vadd.f32 %v2147, %v1706
        %v2156 = vadd.f32 %v2148, %v1707
        %v2157 = vadd.f32 %v2149, %v1708
        %v2158 = vadd.f32 %v2150, %v1709
        %v2159 = vadd.f32 %v2151, %v1710
        %v2160 = vadd.f32 %v2152, %v1711
        %v2161 = vadd.f32 %v2153, %v1712
        %v2162 = vadd.f32 %v2154, %v1713
        %v2163 = vmax.f32 %v2155, 0.0
        %v2164 = vmax.f32 %v2156, 0.0
        %v2165 = vmax.f32 %v2157, 0.0
        %v2166 = vmax.f32 %v2158, 0.0
        %v2167 = vmax.f32 %v2159, 0.0
        %v2168 = vmax.f32 %v2160, 0.0
        %v2169 = vmax.f32 %v2161, 0.0
        %v2170 = vmax.f32 %v2162, 0.0
        %2171 = vst [vmem:[%s325] sm:$0xff] %v2163
        %2172 = vst [vmem:[%s325 + $0x8] sm:$0xff] %v2164
        %2173 = vst [vmem:[%s325 + $0x10] sm:$0xff] %v2165
        %2174 = vst [vmem:[%s325 + $0x18] sm:$0xff] %v2166
        %2175 = vst [vmem:[%s325 + $0x20] sm:$0xff] %v2167
        %2176 = vst [vmem:[%s325 + $0x28] sm:$0xff] %v2168
        %2177 = vst [vmem:[%s325 + $0x30] sm:$0xff] %v2169
        %2178 = vst [vmem:[%s325 + $0x38] sm:$0xff] %v2170
        %s2179 = sand.u32 %s225, 1
        %s2180 = scalar_lea.sflag [#allocation5], %s2179
        %s2181 = sand.u32 %s225, 1
        %s2182 = smul.addr %s2181, 64
        %s2183 = scalar_lea.vmem [#allocation4], %s2182
        // Predicated region
        $region57: #{tpu_custom_call.1} parent=55 // pred_check
          %p2184 = pneg %p235
        $region58: #{tpu_custom_call.1} parent=55 // pred_check_branch
          %2186 = sbr.rel (%p2184) target = $region60
        $region59: #{tpu_custom_call.1} parent=55 // pred_region
          %s2188 = ssub.s32 1024, 1024
          %2189 = vsyncadd %s2180, %s2188
          %s2190 = smul.addr %s23, 8
          %s2191 = smul.addr %s2190, 128
          %s2192 = scalar_lea.hbm %s9, %s2191
          %s2193 = sshll.u32 %s2183, 4
          %s2194 = int_to_ptr.vmem [resolvable:$true] %s2193
          %2199 = dma.vmem_to_hbm [thread:$0]  %s2194, 1024, %s2192, %s2180, 128, 128, 8
        $region60: #{tpu_custom_call.1} parent=55 // pred_fallthru
          _
      $region56: #{tpu_custom_call.1} parent=5 // pred_fallthru
        _
      %p2200 = scmp.le.s32.totalorder 2, %s18
      // Predicated region
      $region61: #{tpu_custom_call.1} parent=5 // pred_check
        %p2201 = pneg %p2200
      $region62: #{tpu_custom_call.1} parent=5 // pred_check_branch
        %2203 = sbr.rel (%p2201) target = $region64
      $region63: #{tpu_custom_call.1} parent=5 // pred_region
        %s2204 = ssub.s32 %s18, 2
        // Predicated region
        $region65: #{tpu_custom_call.1} parent=63 // pred_check
          %p2205 = pneg %p241
        $region66: #{tpu_custom_call.1} parent=63 // pred_check_branch
          %2207 = sbr.rel (%p2205) target = $region68
        $region67: #{tpu_custom_call.1} parent=63 // pred_region
          %s2208 = sand.u32 %s226, 1
          %s2209 = scalar_lea.sflag [#allocation5], %s2208
          %s2210 = sand.u32 %s226, 1
          %s2211 = smul.addr %s2210, 64
          %s2212 = scalar_lea.vmem [#allocation4], %s2211
          %2213 = dma.done %s2209, 1024
        $region68: #{tpu_custom_call.1} parent=63 // pred_fallthru
          _
      $region64: #{tpu_custom_call.1} parent=5 // pred_fallthru
        _
    $region6: #{tpu_custom_call.1} parent=1 // loop_footer
      %s22 = sadd.s32 1, %s18
    $region7: #{tpu_custom_call.1} parent=1 // loop_footer_branch
      %17 = sbr.rel target = $region3
    $region8: #{tpu_custom_call.1} parent=1 // loop_exit
      _
    %2214 = vsyncpa [#allocation5], 1
    %s2215 = scalar_lea.sflag [#allocation5], 1
    %2216 = vsyncpa %s2215, 1

</llo_original>
